<compile_context>
chip_gen: v7x
topology: tpu7x:2x2x1
jax: 0.10.0
libtpu: 0.0.40
codegen_flags: <defaults>
</compile_context>

<pallas_src>
import functools

import numpy as np
import jax
import jax.numpy as jnp
from jax.experimental import pallas as pl
from jax.experimental.pallas import tpu as pltpu


N_BINS = 15
_BOUNDS = np.linspace(0.0, 1.0, N_BINS + 1).astype(np.float32)
BIN_BOUNDARIES = tuple(float(x) for x in _BOUNDS)   # 16 values: 0.0 ... 1.0
BIN_LOWERS = BIN_BOUNDARIES[:-1]
BIN_UPPERS = BIN_BOUNDARIES[1:]

LANES = 128  # TPU vreg lane width


def _classwise_ece_kernel(logits_ref, labels_ref, out_ref, acc_ref,
                          *, apply_softmax, n_total, tile_n):
    # logits_ref: (C, TILE_N) f32   classes on sublanes, batch on lanes
    # labels_ref: (1, TILE_N) i32
    # out_ref   : (C, 1) f32        per-class SCE, written on the last step
    # acc_ref   : (N_BINS+1, C, 128) f32 resident cumulative-threshold sums
    step = pl.program_id(0)
    c = logits_ref.shape[0]

    @pl.when(step == 0)
    def _init():
        acc_ref[...] = jnp.zeros_like(acc_ref)

    x = logits_ref[...]

    if apply_softmax:
        m = jnp.max(x, axis=0, keepdims=True)              # (1, T) sublane reduce
        e = jnp.exp(x - m)                                  # EUP
        denom = jnp.sum(e, axis=0, keepdims=True)           # (1, T)
        probs = e * pl.reciprocal(denom, approx=False)      # keep divide off VALU
    else:
        probs = x

    # Mask padded lanes of the last (partial) tile: 2.0 is above every bin
    # boundary, so those lanes contribute to no cumulative sum.
    if n_total % tile_n != 0:
        pos = step * tile_n + jax.lax.broadcasted_iota(jnp.int32, (1, tile_n), 1)
        probs = jnp.where(pos < n_total, probs, 2.0)

    # One-hot class membership in the same (C, T) layout; fuse into a single
    # (conf - hit) term so only one accumulator is needed.
    class_ids = jax.lax.broadcasted_iota(jnp.int32, (c, tile_n), 0)
    labels_f = (labels_ref[...] == class_ids).astype(jnp.float32)
    diff = probs - labels_f                                  # (C, T)

    n_groups = tile_n // LANES
    for b in range(N_BINS + 1):
        # Cumulative threshold: nested sets, bin b = S_{hi_b} - S_{lo_b}.
        sel = jnp.where(probs <= BIN_BOUNDARIES[b], diff, 0.0)
        # Fold TILE_N lanes to one 128-lane partial with aligned static slices
        # (pure VALU adds); the cross-lane XLU reduce is deferred to the end.
        part = sel[:, 0:LANES]
        for g in range(1, n_groups):
            lo = g * LANES
            part = part + sel[:, lo:lo + LANES]
        acc_ref[b] = acc_ref[b] + part

    @pl.when(step == pl.num_programs(0) - 1)
    def _finalize():
        total = jnp.zeros((c, 1), jnp.float32)
        prev = jnp.sum(acc_ref[0], axis=1, keepdims=True)    # boundary 0.0
        for b in range(N_BINS):
            cur = jnp.sum(acc_ref[b + 1], axis=1, keepdims=True)   # (C, 1)
            total = total + jnp.abs(cur - prev)
            prev = cur
        out_ref[...] = total * (1.0 / float(n_total))


def classwise_ece(logits, labels, softmax=True, num_classes=None, tile_n=512):
    """JAX/Pallas equivalent of ClassWiseECELoss.forward -> (sce, per_class_sce).

    If `num_classes` is None, the data-dependent class count max(labels)+1 is
    handled on device with a masked mean (no host sync); the returned per-class
    vector then has static length C and entries >= num_classes are unused.
    """
    logits = jnp.asarray(logits, jnp.float32)
    labels = jnp.asarray(labels, jnp.int32)
    n, c = logits.shape

    # Lane-dense working layout for small C: classes on sublanes, batch on lanes.
    logits_t = logits.T                    # (C, N)
    labels2d = labels.reshape(1, n)

    tile_n = max(LANES, (int(tile_n) // LANES) * LANES)
    tile_n = min(tile_n, pl.cdiv(n, LANES) * LANES)   # don't overshoot tiny N
    grid = (pl.cdiv(n, tile_n),)

    kernel = functools.partial(_classwise_ece_kernel, apply_softmax=softmax,
                               n_total=n, tile_n=tile_n)

    per_class_all = pl.pallas_call(
        kernel,
        out_shape=jax.ShapeDtypeStruct((c, 1), jnp.float32),
        grid=grid,
        in_specs=[
            pl.BlockSpec((c, tile_n), lambda i: (0, i)),
            pl.BlockSpec((1, tile_n), lambda i: (0, i)),
        ],
        out_specs=pl.BlockSpec((c, 1), lambda i: (0, 0)),
        scratch_shapes=[
            pltpu.VMEM((N_BINS + 1, c, LANES), jnp.float32),
        ],
        compiler_params=pltpu.CompilerParams(
            # The single grid axis is a reduction over the batch (resident
            # accumulator scratch + resident output block) -> "arbitrary".
            dimension_semantics=("arbitrary",),
            # Small working set (~64 KiB scratch + double-buffered tiles);
            # explicit budget keeps headroom for large class counts.
            vmem_limit_bytes=32 * 1024 * 1024,
        ),
    )(logits_t, labels2d)[:, 0]

    if num_classes is not None:                        # static class count
        per_class = per_class_all[:num_classes]
        return jnp.mean(per_class), per_class

    # TODO(synk): the PyTorch module returns a tensor whose length is the
    # data-dependent value max(labels)+1; a dynamic-length output has no jit
    # equivalent, so we return the fixed-length vector and mask on device.
    ncls = jnp.max(labels) + 1
    col_mask = (jnp.arange(c, dtype=jnp.int32) < ncls).astype(jnp.float32)
    sce = jnp.sum(per_class_all * col_mask) / ncls.astype(jnp.float32)
    return sce, per_class_all


def _reference_numpy(logits, labels, softmax=True):
    logits = np.asarray(logits, dtype=np.float32)
    labels = np.asarray(labels, dtype=np.int64)
    num_classes = int(labels.max()) + 1
    if softmax:
        e = np.exp(logits - logits.max(axis=1, keepdims=True))
        probs = e / e.sum(axis=1, keepdims=True)
    else:
        probs = logits
    per_class = []
    for i in range(num_classes):
        conf = probs[:, i]
        in_cls = labels == i
        sce = 0.0
        for lo, hi in zip(BIN_LOWERS, BIN_UPPERS):
            in_bin = (conf > lo) & (conf <= hi)
            prop = in_bin.mean()
            if prop > 0:
                acc = in_cls[in_bin].astype(np.float32).mean()
                avg_conf = conf[in_bin].mean()
                sce += abs(avg_conf - acc) * prop
        per_class.append(sce)
    per_class = np.array(per_class, dtype=np.float32)
    return per_class.mean(), per_class


if __name__ == "__main__":
    key = jax.random.PRNGKey(0)
    k1, k2 = jax.random.split(key)
    # N=600 with TILE_N=512 -> 2 grid steps + a partial last tile, exercising
    # both the cross-tile accumulation and the out-of-range lane masking.
    N, C = 600, 8
    logits = jax.random.normal(k1, (N, C), dtype=jnp.float32) * 2.0
    labels = jax.random.randint(k2, (N,), 0, C, dtype=jnp.int32)

    ece_fn = jax.jit(lambda lg, lb: classwise_ece(lg, lb, softmax=True))
    sce, per_class_all = ece_fn(logits, labels)
    jax.block_until_ready((sce, per_class_all))

    ref_sce, ref_per_class = _reference_numpy(np.asarray(logits), np.asarray(labels))
    ncls = ref_per_class.shape[0]
    np.testing.assert_allclose(np.asarray(per_class_all)[:ncls], ref_per_class,
                               rtol=1e-4, atol=1e-5)
    np.testing.assert_allclose(float(sce), ref_sce, rtol=1e-4, atol=1e-5)

    print("KERNEL_OK")
</pallas_src>

<mosaic_0001>
module attributes {stable_mosaic.version = 11 : i64} {
  func.func @_classwise_ece_kernel(%arg0: i32, %arg1: memref<8x512xf32, #tpu.memory_space<vmem>>, %arg2: memref<1x512xi32, #tpu.memory_space<vmem>>, %arg3: memref<8x1xf32, #tpu.memory_space<vmem>>, %arg4: memref<16x8x128xf32, #tpu.memory_space<vmem>>) attributes {dimension_semantics = [#tpu.dimension_semantics<arbitrary>], iteration_bounds = array<i64: 2>, scalar_prefetch = 0 : i64, scratch_operands = 1 : i64, tpu.core_type = #tpu.core_type<tc>, window_params = [{transform_indices = @transform_0, window_bounds = array<i64: 8, 512>}, {transform_indices = @transform_1, window_bounds = array<i64: 1, 512>}, {pipeline_mode = #tpu.pipeline_mode<synchronous>, transform_indices = @transform_2, window_bounds = array<i64: 8, 1>}]} {
    %c0_i32 = arith.constant 0 : i32
    %0 = arith.cmpi eq, %arg0, %c0_i32 : i32
    %1 = arith.extui %0 : i1 to i32
    %c0_i32_0 = arith.constant 0 : i32
    %2 = arith.cmpi ne, %1, %c0_i32_0 : i32
    scf.if %2 {
      %cst_120 = arith.constant 0.000000e+00 : f32
      %306 = vector.broadcast %cst_120 : f32 to vector<16x8x128xf32>
      %c0_121 = arith.constant 0 : index
      %c0_122 = arith.constant 0 : index
      %c0_123 = arith.constant 0 : index
      %307 = vector.load %arg4[%c0_121, %c0_122, %c0_123] : memref<16x8x128xf32, #tpu.memory_space<vmem>>, vector<16x8x128xf32>
      tpu.vector_store %arg4[%c0_121, %c0_122, %c0_123], %306 {strides = array<i32>} : memref<16x8x128xf32, #tpu.memory_space<vmem>>, vector<16x8x128xf32>,
    } else {
    }
    %c0 = arith.constant 0 : index
    %c0_1 = arith.constant 0 : index
    %3 = vector.load %arg1[%c0, %c0_1] : memref<8x512xf32, #tpu.memory_space<vmem>>, vector<8x512xf32>
    %cst = arith.constant dense<0xFF800000> : vector<512xf32>
    %4 = vector.multi_reduction <maximumf>, %3, %cst [0] : vector<8x512xf32> to vector<512xf32>
    %5 = vector.shape_cast %4 : vector<512xf32> to vector<1x512xf32>
    %6 = vector.broadcast %5 : vector<1x512xf32> to vector<8x512xf32>
    %7 = arith.subf %3, %6 : vector<8x512xf32>
    %8 = math.exp %7 : vector<8x512xf32>
    %cst_2 = arith.constant dense<0.000000e+00> : vector<512xf32>
    %9 = vector.multi_reduction <add>, %8, %cst_2 [0] : vector<8x512xf32> to vector<512xf32>
    %10 = vector.shape_cast %9 : vector<512xf32> to vector<1x512xf32>
    %11 = tpu.reciprocal %10 : vector<1x512xf32> -> vector<1x512xf32>
    %12 = vector.broadcast %11 : vector<1x512xf32> to vector<8x512xf32>
    %13 = arith.mulf %8, %12 : vector<8x512xf32>
    %c512_i32 = arith.constant 512 : i32
    %14 = arith.muli %arg0, %c512_i32 : i32
    %15 = tpu.iota {dimensions = array<i32: 1>} : vector<1x512xi32>
    %16 = vector.broadcast %14 : i32 to vector<1x512xi32>
    %17 = arith.addi %16, %15 : vector<1x512xi32>
    %c600_i32 = arith.constant 600 : i32
    %18 = vector.broadcast %c600_i32 : i32 to vector<1x512xi32>
    %19 = arith.cmpi slt, %17, %18 : vector<1x512xi32>
    %cst_3 = arith.constant 2.000000e+00 : f32
    %20 = vector.shape_cast %19 : vector<1x512xi1> to vector<1x512xi1>
    %21 = vector.broadcast %20 : vector<1x512xi1> to vector<8x512xi1>
    %22 = vector.broadcast %cst_3 : f32 to vector<8x512xf32>
    %23 = arith.select %21, %13, %22 : vector<8x512xi1>, vector<8x512xf32>
    %24 = tpu.iota {dimensions = array<i32: 0>} : vector<8x512xi32>
    %c0_4 = arith.constant 0 : index
    %c0_5 = arith.constant 0 : index
    %25 = vector.load %arg2[%c0_4, %c0_5] : memref<1x512xi32, #tpu.memory_space<vmem>>, vector<1x512xi32>
    %26 = vector.broadcast %25 : vector<1x512xi32> to vector<8x512xi32>
    %27 = arith.cmpi eq, %26, %24 : vector<8x512xi32>
    %28 = arith.extui %27 : vector<8x512xi1> to vector<8x512xi32>
    %29 = arith.sitofp %28 : vector<8x512xi32> to vector<8x512xf32>
    %30 = arith.subf %23, %29 : vector<8x512xf32>
    %cst_6 = arith.constant 0.000000e+00 : f32
    %31 = vector.broadcast %cst_6 : f32 to vector<8x512xf32>
    %32 = arith.cmpf ole, %23, %31 : vector<8x512xf32>
    %cst_7 = arith.constant 0.000000e+00 : f32
    %33 = vector.broadcast %cst_7 : f32 to vector<8x512xf32>
    %34 = arith.select %32, %30, %33 : vector<8x512xi1>, vector<8x512xf32>
    %35 = vector.extract_strided_slice %34 {offsets = [0, 0], sizes = [8, 128], strides = [1, 1]} : vector<8x512xf32> to vector<8x128xf32>
    %36 = vector.extract_strided_slice %34 {offsets = [0, 128], sizes = [8, 128], strides = [1, 1]} : vector<8x512xf32> to vector<8x128xf32>
    %37 = arith.addf %35, %36 : vector<8x128xf32>
    %38 = vector.extract_strided_slice %34 {offsets = [0, 256], sizes = [8, 128], strides = [1, 1]} : vector<8x512xf32> to vector<8x128xf32>
    %39 = arith.addf %37, %38 : vector<8x128xf32>
    %40 = vector.extract_strided_slice %34 {offsets = [0, 384], sizes = [8, 128], strides = [1, 1]} : vector<8x512xf32> to vector<8x128xf32>
    %41 = arith.addf %39, %40 : vector<8x128xf32>
    %c0_8 = arith.constant 0 : index
    %c0_9 = arith.constant 0 : index
    %c0_10 = arith.constant 0 : index
    %42 = vector.load %arg4[%c0_8, %c0_9, %c0_10] : memref<16x8x128xf32, #tpu.memory_space<vmem>>, vector<1x8x128xf32>
    %43 = vector.shape_cast %42 : vector<1x8x128xf32> to vector<8x128xf32>
    %44 = arith.addf %43, %41 : vector<8x128xf32>
    %c0_11 = arith.constant 0 : index
    %c0_12 = arith.constant 0 : index
    %c0_13 = arith.constant 0 : index
    %45 = vector.load %arg4[%c0_11, %c0_12, %c0_13] : memref<16x8x128xf32, #tpu.memory_space<vmem>>, vector<1x8x128xf32>
    %46 = vector.shape_cast %45 : vector<1x8x128xf32> to vector<8x128xf32>
    %47 = vector.shape_cast %44 : vector<8x128xf32> to vector<1x8x128xf32>
    tpu.vector_store %arg4[%c0_11, %c0_12, %c0_13], %47 {strides = array<i32>} : memref<16x8x128xf32, #tpu.memory_space<vmem>>, vector<1x8x128xf32>,
    %cst_14 = arith.constant 0.0666666701 : f32
    %48 = vector.broadcast %cst_14 : f32 to vector<8x512xf32>
    %49 = arith.cmpf ole, %23, %48 : vector<8x512xf32>
    %cst_15 = arith.constant 0.000000e+00 : f32
    %50 = vector.broadcast %cst_15 : f32 to vector<8x512xf32>
    %51 = arith.select %49, %30, %50 : vector<8x512xi1>, vector<8x512xf32>
    %52 = vector.extract_strided_slice %51 {offsets = [0, 0], sizes = [8, 128], strides = [1, 1]} : vector<8x512xf32> to vector<8x128xf32>
    %53 = vector.extract_strided_slice %51 {offsets = [0, 128], sizes = [8, 128], strides = [1, 1]} : vector<8x512xf32> to vector<8x128xf32>
    %54 = arith.addf %52, %53 : vector<8x128xf32>
    %55 = vector.extract_strided_slice %51 {offsets = [0, 256], sizes = [8, 128], strides = [1, 1]} : vector<8x512xf32> to vector<8x128xf32>
    %56 = arith.addf %54, %55 : vector<8x128xf32>
    %57 = vector.extract_strided_slice %51 {offsets = [0, 384], sizes = [8, 128], strides = [1, 1]} : vector<8x512xf32> to vector<8x128xf32>
    %58 = arith.addf %56, %57 : vector<8x128xf32>
    %c1 = arith.constant 1 : index
    %c0_16 = arith.constant 0 : index
    %c0_17 = arith.constant 0 : index
    %59 = vector.load %arg4[%c1, %c0_16, %c0_17] : memref<16x8x128xf32, #tpu.memory_space<vmem>>, vector<1x8x128xf32>
    %60 = vector.shape_cast %59 : vector<1x8x128xf32> to vector<8x128xf32>
    %61 = arith.addf %60, %58 : vector<8x128xf32>
    %c1_18 = arith.constant 1 : index
    %c0_19 = arith.constant 0 : index
    %c0_20 = arith.constant 0 : index
    %62 = vector.load %arg4[%c1_18, %c0_19, %c0_20] : memref<16x8x128xf32, #tpu.memory_space<vmem>>, vector<1x8x128xf32>
    %63 = vector.shape_cast %62 : vector<1x8x128xf32> to vector<8x128xf32>
    %64 = vector.shape_cast %61 : vector<8x128xf32> to vector<1x8x128xf32>
    tpu.vector_store %arg4[%c1_18, %c0_19, %c0_20], %64 {strides = array<i32>} : memref<16x8x128xf32, #tpu.memory_space<vmem>>, vector<1x8x128xf32>,
    %cst_21 = arith.constant 0.13333334 : f32
    %65 = vector.broadcast %cst_21 : f32 to vector<8x512xf32>
    %66 = arith.cmpf ole, %23, %65 : vector<8x512xf32>
    %cst_22 = arith.constant 0.000000e+00 : f32
    %67 = vector.broadcast %cst_22 : f32 to vector<8x512xf32>
    %68 = arith.select %66, %30, %67 : vector<8x512xi1>, vector<8x512xf32>
    %69 = vector.extract_strided_slice %68 {offsets = [0, 0], sizes = [8, 128], strides = [1, 1]} : vector<8x512xf32> to vector<8x128xf32>
    %70 = vector.extract_strided_slice %68 {offsets = [0, 128], sizes = [8, 128], strides = [1, 1]} : vector<8x512xf32> to vector<8x128xf32>
    %71 = arith.addf %69, %70 : vector<8x128xf32>
    %72 = vector.extract_strided_slice %68 {offsets = [0, 256], sizes = [8, 128], strides = [1, 1]} : vector<8x512xf32> to vector<8x128xf32>
    %73 = arith.addf %71, %72 : vector<8x128xf32>
    %74 = vector.extract_strided_slice %68 {offsets = [0, 384], sizes = [8, 128], strides = [1, 1]} : vector<8x512xf32> to vector<8x128xf32>
    %75 = arith.addf %73, %74 : vector<8x128xf32>
    %c2 = arith.constant 2 : index
    %c0_23 = arith.constant 0 : index
    %c0_24 = arith.constant 0 : index
    %76 = vector.load %arg4[%c2, %c0_23, %c0_24] : memref<16x8x128xf32, #tpu.memory_space<vmem>>, vector<1x8x128xf32>
    %77 = vector.shape_cast %76 : vector<1x8x128xf32> to vector<8x128xf32>
    %78 = arith.addf %77, %75 : vector<8x128xf32>
    %c2_25 = arith.constant 2 : index
    %c0_26 = arith.constant 0 : index
    %c0_27 = arith.constant 0 : index
    %79 = vector.load %arg4[%c2_25, %c0_26, %c0_27] : memref<16x8x128xf32, #tpu.memory_space<vmem>>, vector<1x8x128xf32>
    %80 = vector.shape_cast %79 : vector<1x8x128xf32> to vector<8x128xf32>
    %81 = vector.shape_cast %78 : vector<8x128xf32> to vector<1x8x128xf32>
    tpu.vector_store %arg4[%c2_25, %c0_26, %c0_27], %81 {strides = array<i32>} : memref<16x8x128xf32, #tpu.memory_space<vmem>>, vector<1x8x128xf32>,
    %cst_28 = arith.constant 2.000000e-01 : f32
    %82 = vector.broadcast %cst_28 : f32 to vector<8x512xf32>
    %83 = arith.cmpf ole, %23, %82 : vector<8x512xf32>
    %cst_29 = arith.constant 0.000000e+00 : f32
    %84 = vector.broadcast %cst_29 : f32 to vector<8x512xf32>
    %85 = arith.select %83, %30, %84 : vector<8x512xi1>, vector<8x512xf32>
    %86 = vector.extract_strided_slice %85 {offsets = [0, 0], sizes = [8, 128], strides = [1, 1]} : vector<8x512xf32> to vector<8x128xf32>
    %87 = vector.extract_strided_slice %85 {offsets = [0, 128], sizes = [8, 128], strides = [1, 1]} : vector<8x512xf32> to vector<8x128xf32>
    %88 = arith.addf %86, %87 : vector<8x128xf32>
    %89 = vector.extract_strided_slice %85 {offsets = [0, 256], sizes = [8, 128], strides = [1, 1]} : vector<8x512xf32> to vector<8x128xf32>
    %90 = arith.addf %88, %89 : vector<8x128xf32>
    %91 = vector.extract_strided_slice %85 {offsets = [0, 384], sizes = [8, 128], strides = [1, 1]} : vector<8x512xf32> to vector<8x128xf32>
    %92 = arith.addf %90, %91 : vector<8x128xf32>
    %c3 = arith.constant 3 : index
    %c0_30 = arith.constant 0 : index
    %c0_31 = arith.constant 0 : index
    %93 = vector.load %arg4[%c3, %c0_30, %c0_31] : memref<16x8x128xf32, #tpu.memory_space<vmem>>, vector<1x8x128xf32>
    %94 = vector.shape_cast %93 : vector<1x8x128xf32> to vector<8x128xf32>
    %95 = arith.addf %94, %92 : vector<8x128xf32>
    %c3_32 = arith.constant 3 : index
    %c0_33 = arith.constant 0 : index
    %c0_34 = arith.constant 0 : index
    %96 = vector.load %arg4[%c3_32, %c0_33, %c0_34] : memref<16x8x128xf32, #tpu.memory_space<vmem>>, vector<1x8x128xf32>
    %97 = vector.shape_cast %96 : vector<1x8x128xf32> to vector<8x128xf32>
    %98 = vector.shape_cast %95 : vector<8x128xf32> to vector<1x8x128xf32>
    tpu.vector_store %arg4[%c3_32, %c0_33, %c0_34], %98 {strides = array<i32>} : memref<16x8x128xf32, #tpu.memory_space<vmem>>, vector<1x8x128xf32>,
    %cst_35 = arith.constant 0.266666681 : f32
    %99 = vector.broadcast %cst_35 : f32 to vector<8x512xf32>
    %100 = arith.cmpf ole, %23, %99 : vector<8x512xf32>
    %cst_36 = arith.constant 0.000000e+00 : f32
    %101 = vector.broadcast %cst_36 : f32 to vector<8x512xf32>
    %102 = arith.select %100, %30, %101 : vector<8x512xi1>, vector<8x512xf32>
    %103 = vector.extract_strided_slice %102 {offsets = [0, 0], sizes = [8, 128], strides = [1, 1]} : vector<8x512xf32> to vector<8x128xf32>
    %104 = vector.extract_strided_slice %102 {offsets = [0, 128], sizes = [8, 128], strides = [1, 1]} : vector<8x512xf32> to vector<8x128xf32>
    %105 = arith.addf %103, %104 : vector<8x128xf32>
    %106 = vector.extract_strided_slice %102 {offsets = [0, 256], sizes = [8, 128], strides = [1, 1]} : vector<8x512xf32> to vector<8x128xf32>
    %107 = arith.addf %105, %106 : vector<8x128xf32>
    %108 = vector.extract_strided_slice %102 {offsets = [0, 384], sizes = [8, 128], strides = [1, 1]} : vector<8x512xf32> to vector<8x128xf32>
    %109 = arith.addf %107, %108 : vector<8x128xf32>
    %c4 = arith.constant 4 : index
    %c0_37 = arith.constant 0 : index
    %c0_38 = arith.constant 0 : index
    %110 = vector.load %arg4[%c4, %c0_37, %c0_38] : memref<16x8x128xf32, #tpu.memory_space<vmem>>, vector<1x8x128xf32>
    %111 = vector.shape_cast %110 : vector<1x8x128xf32> to vector<8x128xf32>
    %112 = arith.addf %111, %109 : vector<8x128xf32>
    %c4_39 = arith.constant 4 : index
    %c0_40 = arith.constant 0 : index
    %c0_41 = arith.constant 0 : index
    %113 = vector.load %arg4[%c4_39, %c0_40, %c0_41] : memref<16x8x128xf32, #tpu.memory_space<vmem>>, vector<1x8x128xf32>
    %114 = vector.shape_cast %113 : vector<1x8x128xf32> to vector<8x128xf32>
    %115 = vector.shape_cast %112 : vector<8x128xf32> to vector<1x8x128xf32>
    tpu.vector_store %arg4[%c4_39, %c0_40, %c0_41], %115 {strides = array<i32>} : memref<16x8x128xf32, #tpu.memory_space<vmem>>, vector<1x8x128xf32>,
    %cst_42 = arith.constant 0.333333343 : f32
    %116 = vector.broadcast %cst_42 : f32 to vector<8x512xf32>
    %117 = arith.cmpf ole, %23, %116 : vector<8x512xf32>
    %cst_43 = arith.constant 0.000000e+00 : f32
    %118 = vector.broadcast %cst_43 : f32 to vector<8x512xf32>
    %119 = arith.select %117, %30, %118 : vector<8x512xi1>, vector<8x512xf32>
    %120 = vector.extract_strided_slice %119 {offsets = [0, 0], sizes = [8, 128], strides = [1, 1]} : vector<8x512xf32> to vector<8x128xf32>
    %121 = vector.extract_strided_slice %119 {offsets = [0, 128], sizes = [8, 128], strides = [1, 1]} : vector<8x512xf32> to vector<8x128xf32>
    %122 = arith.addf %120, %121 : vector<8x128xf32>
    %123 = vector.extract_strided_slice %119 {offsets = [0, 256], sizes = [8, 128], strides = [1, 1]} : vector<8x512xf32> to vector<8x128xf32>
    %124 = arith.addf %122, %123 : vector<8x128xf32>
    %125 = vector.extract_strided_slice %119 {offsets = [0, 384], sizes = [8, 128], strides = [1, 1]} : vector<8x512xf32> to vector<8x128xf32>
    %126 = arith.addf %124, %125 : vector<8x128xf32>
    %c5 = arith.constant 5 : index
    %c0_44 = arith.constant 0 : index
    %c0_45 = arith.constant 0 : index
    %127 = vector.load %arg4[%c5, %c0_44, %c0_45] : memref<16x8x128xf32, #tpu.memory_space<vmem>>, vector<1x8x128xf32>
    %128 = vector.shape_cast %127 : vector<1x8x128xf32> to vector<8x128xf32>
    %129 = arith.addf %128, %126 : vector<8x128xf32>
    %c5_46 = arith.constant 5 : index
    %c0_47 = arith.constant 0 : index
    %c0_48 = arith.constant 0 : index
    %130 = vector.load %arg4[%c5_46, %c0_47, %c0_48] : memref<16x8x128xf32, #tpu.memory_space<vmem>>, vector<1x8x128xf32>
    %131 = vector.shape_cast %130 : vector<1x8x128xf32> to vector<8x128xf32>
    %132 = vector.shape_cast %129 : vector<8x128xf32> to vector<1x8x128xf32>
    tpu.vector_store %arg4[%c5_46, %c0_47, %c0_48], %132 {strides = array<i32>} : memref<16x8x128xf32, #tpu.memory_space<vmem>>, vector<1x8x128xf32>,
    %cst_49 = arith.constant 4.000000e-01 : f32
    %133 = vector.broadcast %cst_49 : f32 to vector<8x512xf32>
    %134 = arith.cmpf ole, %23, %133 : vector<8x512xf32>
    %cst_50 = arith.constant 0.000000e+00 : f32
    %135 = vector.broadcast %cst_50 : f32 to vector<8x512xf32>
    %136 = arith.select %134, %30, %135 : vector<8x512xi1>, vector<8x512xf32>
    %137 = vector.extract_strided_slice %136 {offsets = [0, 0], sizes = [8, 128], strides = [1, 1]} : vector<8x512xf32> to vector<8x128xf32>
    %138 = vector.extract_strided_slice %136 {offsets = [0, 128], sizes = [8, 128], strides = [1, 1]} : vector<8x512xf32> to vector<8x128xf32>
    %139 = arith.addf %137, %138 : vector<8x128xf32>
    %140 = vector.extract_strided_slice %136 {offsets = [0, 256], sizes = [8, 128], strides = [1, 1]} : vector<8x512xf32> to vector<8x128xf32>
    %141 = arith.addf %139, %140 : vector<8x128xf32>
    %142 = vector.extract_strided_slice %136 {offsets = [0, 384], sizes = [8, 128], strides = [1, 1]} : vector<8x512xf32> to vector<8x128xf32>
    %143 = arith.addf %141, %142 : vector<8x128xf32>
    %c6 = arith.constant 6 : index
    %c0_51 = arith.constant 0 : index
    %c0_52 = arith.constant 0 : index
    %144 = vector.load %arg4[%c6, %c0_51, %c0_52] : memref<16x8x128xf32, #tpu.memory_space<vmem>>, vector<1x8x128xf32>
    %145 = vector.shape_cast %144 : vector<1x8x128xf32> to vector<8x128xf32>
    %146 = arith.addf %145, %143 : vector<8x128xf32>
    %c6_53 = arith.constant 6 : index
    %c0_54 = arith.constant 0 : index
    %c0_55 = arith.constant 0 : index
    %147 = vector.load %arg4[%c6_53, %c0_54, %c0_55] : memref<16x8x128xf32, #tpu.memory_space<vmem>>, vector<1x8x128xf32>
    %148 = vector.shape_cast %147 : vector<1x8x128xf32> to vector<8x128xf32>
    %149 = vector.shape_cast %146 : vector<8x128xf32> to vector<1x8x128xf32>
    tpu.vector_store %arg4[%c6_53, %c0_54, %c0_55], %149 {strides = array<i32>} : memref<16x8x128xf32, #tpu.memory_space<vmem>>, vector<1x8x128xf32>,
    %cst_56 = arith.constant 0.466666669 : f32
    %150 = vector.broadcast %cst_56 : f32 to vector<8x512xf32>
    %151 = arith.cmpf ole, %23, %150 : vector<8x512xf32>
    %cst_57 = arith.constant 0.000000e+00 : f32
    %152 = vector.broadcast %cst_57 : f32 to vector<8x512xf32>
    %153 = arith.select %151, %30, %152 : vector<8x512xi1>, vector<8x512xf32>
    %154 = vector.extract_strided_slice %153 {offsets = [0, 0], sizes = [8, 128], strides = [1, 1]} : vector<8x512xf32> to vector<8x128xf32>
    %155 = vector.extract_strided_slice %153 {offsets = [0, 128], sizes = [8, 128], strides = [1, 1]} : vector<8x512xf32> to vector<8x128xf32>
    %156 = arith.addf %154, %155 : vector<8x128xf32>
    %157 = vector.extract_strided_slice %153 {offsets = [0, 256], sizes = [8, 128], strides = [1, 1]} : vector<8x512xf32> to vector<8x128xf32>
    %158 = arith.addf %156, %157 : vector<8x128xf32>
    %159 = vector.extract_strided_slice %153 {offsets = [0, 384], sizes = [8, 128], strides = [1, 1]} : vector<8x512xf32> to vector<8x128xf32>
    %160 = arith.addf %158, %159 : vector<8x128xf32>
    %c7 = arith.constant 7 : index
    %c0_58 = arith.constant 0 : index
    %c0_59 = arith.constant 0 : index
    %161 = vector.load %arg4[%c7, %c0_58, %c0_59] : memref<16x8x128xf32, #tpu.memory_space<vmem>>, vector<1x8x128xf32>
    %162 = vector.shape_cast %161 : vector<1x8x128xf32> to vector<8x128xf32>
    %163 = arith.addf %162, %160 : vector<8x128xf32>
    %c7_60 = arith.constant 7 : index
    %c0_61 = arith.constant 0 : index
    %c0_62 = arith.constant 0 : index
    %164 = vector.load %arg4[%c7_60, %c0_61, %c0_62] : memref<16x8x128xf32, #tpu.memory_space<vmem>>, vector<1x8x128xf32>
    %165 = vector.shape_cast %164 : vector<1x8x128xf32> to vector<8x128xf32>
    %166 = vector.shape_cast %163 : vector<8x128xf32> to vector<1x8x128xf32>
    tpu.vector_store %arg4[%c7_60, %c0_61, %c0_62], %166 {strides = array<i32>} : memref<16x8x128xf32, #tpu.memory_space<vmem>>, vector<1x8x128xf32>,
    %cst_63 = arith.constant 0.533333361 : f32
    %167 = vector.broadcast %cst_63 : f32 to vector<8x512xf32>
    %168 = arith.cmpf ole, %23, %167 : vector<8x512xf32>
    %cst_64 = arith.constant 0.000000e+00 : f32
    %169 = vector.broadcast %cst_64 : f32 to vector<8x512xf32>
    %170 = arith.select %168, %30, %169 : vector<8x512xi1>, vector<8x512xf32>
    %171 = vector.extract_strided_slice %170 {offsets = [0, 0], sizes = [8, 128], strides = [1, 1]} : vector<8x512xf32> to vector<8x128xf32>
    %172 = vector.extract_strided_slice %170 {offsets = [0, 128], sizes = [8, 128], strides = [1, 1]} : vector<8x512xf32> to vector<8x128xf32>
    %173 = arith.addf %171, %172 : vector<8x128xf32>
    %174 = vector.extract_strided_slice %170 {offsets = [0, 256], sizes = [8, 128], strides = [1, 1]} : vector<8x512xf32> to vector<8x128xf32>
    %175 = arith.addf %173, %174 : vector<8x128xf32>
    %176 = vector.extract_strided_slice %170 {offsets = [0, 384], sizes = [8, 128], strides = [1, 1]} : vector<8x512xf32> to vector<8x128xf32>
    %177 = arith.addf %175, %176 : vector<8x128xf32>
    %c8 = arith.constant 8 : index
    %c0_65 = arith.constant 0 : index
    %c0_66 = arith.constant 0 : index
    %178 = vector.load %arg4[%c8, %c0_65, %c0_66] : memref<16x8x128xf32, #tpu.memory_space<vmem>>, vector<1x8x128xf32>
    %179 = vector.shape_cast %178 : vector<1x8x128xf32> to vector<8x128xf32>
    %180 = arith.addf %179, %177 : vector<8x128xf32>
    %c8_67 = arith.constant 8 : index
    %c0_68 = arith.constant 0 : index
    %c0_69 = arith.constant 0 : index
    %181 = vector.load %arg4[%c8_67, %c0_68, %c0_69] : memref<16x8x128xf32, #tpu.memory_space<vmem>>, vector<1x8x128xf32>
    %182 = vector.shape_cast %181 : vector<1x8x128xf32> to vector<8x128xf32>
    %183 = vector.shape_cast %180 : vector<8x128xf32> to vector<1x8x128xf32>
    tpu.vector_store %arg4[%c8_67, %c0_68, %c0_69], %183 {strides = array<i32>} : memref<16x8x128xf32, #tpu.memory_space<vmem>>, vector<1x8x128xf32>,
    %cst_70 = arith.constant 6.000000e-01 : f32
    %184 = vector.broadcast %cst_70 : f32 to vector<8x512xf32>
    %185 = arith.cmpf ole, %23, %184 : vector<8x512xf32>
    %cst_71 = arith.constant 0.000000e+00 : f32
    %186 = vector.broadcast %cst_71 : f32 to vector<8x512xf32>
    %187 = arith.select %185, %30, %186 : vector<8x512xi1>, vector<8x512xf32>
    %188 = vector.extract_strided_slice %187 {offsets = [0, 0], sizes = [8, 128], strides = [1, 1]} : vector<8x512xf32> to vector<8x128xf32>
    %189 = vector.extract_strided_slice %187 {offsets = [0, 128], sizes = [8, 128], strides = [1, 1]} : vector<8x512xf32> to vector<8x128xf32>
    %190 = arith.addf %188, %189 : vector<8x128xf32>
    %191 = vector.extract_strided_slice %187 {offsets = [0, 256], sizes = [8, 128], strides = [1, 1]} : vector<8x512xf32> to vector<8x128xf32>
    %192 = arith.addf %190, %191 : vector<8x128xf32>
    %193 = vector.extract_strided_slice %187 {offsets = [0, 384], sizes = [8, 128], strides = [1, 1]} : vector<8x512xf32> to vector<8x128xf32>
    %194 = arith.addf %192, %193 : vector<8x128xf32>
    %c9 = arith.constant 9 : index
    %c0_72 = arith.constant 0 : index
    %c0_73 = arith.constant 0 : index
    %195 = vector.load %arg4[%c9, %c0_72, %c0_73] : memref<16x8x128xf32, #tpu.memory_space<vmem>>, vector<1x8x128xf32>
    %196 = vector.shape_cast %195 : vector<1x8x128xf32> to vector<8x128xf32>
    %197 = arith.addf %196, %194 : vector<8x128xf32>
    %c9_74 = arith.constant 9 : index
    %c0_75 = arith.constant 0 : index
    %c0_76 = arith.constant 0 : index
    %198 = vector.load %arg4[%c9_74, %c0_75, %c0_76] : memref<16x8x128xf32, #tpu.memory_space<vmem>>, vector<1x8x128xf32>
    %199 = vector.shape_cast %198 : vector<1x8x128xf32> to vector<8x128xf32>
    %200 = vector.shape_cast %197 : vector<8x128xf32> to vector<1x8x128xf32>
    tpu.vector_store %arg4[%c9_74, %c0_75, %c0_76], %200 {strides = array<i32>} : memref<16x8x128xf32, #tpu.memory_space<vmem>>, vector<1x8x128xf32>,
    %cst_77 = arith.constant 0.666666686 : f32
    %201 = vector.broadcast %cst_77 : f32 to vector<8x512xf32>
    %202 = arith.cmpf ole, %23, %201 : vector<8x512xf32>
    %cst_78 = arith.constant 0.000000e+00 : f32
    %203 = vector.broadcast %cst_78 : f32 to vector<8x512xf32>
    %204 = arith.select %202, %30, %203 : vector<8x512xi1>, vector<8x512xf32>
    %205 = vector.extract_strided_slice %204 {offsets = [0, 0], sizes = [8, 128], strides = [1, 1]} : vector<8x512xf32> to vector<8x128xf32>
    %206 = vector.extract_strided_slice %204 {offsets = [0, 128], sizes = [8, 128], strides = [1, 1]} : vector<8x512xf32> to vector<8x128xf32>
    %207 = arith.addf %205, %206 : vector<8x128xf32>
    %208 = vector.extract_strided_slice %204 {offsets = [0, 256], sizes = [8, 128], strides = [1, 1]} : vector<8x512xf32> to vector<8x128xf32>
    %209 = arith.addf %207, %208 : vector<8x128xf32>
    %210 = vector.extract_strided_slice %204 {offsets = [0, 384], sizes = [8, 128], strides = [1, 1]} : vector<8x512xf32> to vector<8x128xf32>
    %211 = arith.addf %209, %210 : vector<8x128xf32>
    %c10 = arith.constant 10 : index
    %c0_79 = arith.constant 0 : index
    %c0_80 = arith.constant 0 : index
    %212 = vector.load %arg4[%c10, %c0_79, %c0_80] : memref<16x8x128xf32, #tpu.memory_space<vmem>>, vector<1x8x128xf32>
    %213 = vector.shape_cast %212 : vector<1x8x128xf32> to vector<8x128xf32>
    %214 = arith.addf %213, %211 : vector<8x128xf32>
    %c10_81 = arith.constant 10 : index
    %c0_82 = arith.constant 0 : index
    %c0_83 = arith.constant 0 : index
    %215 = vector.load %arg4[%c10_81, %c0_82, %c0_83] : memref<16x8x128xf32, #tpu.memory_space<vmem>>, vector<1x8x128xf32>
    %216 = vector.shape_cast %215 : vector<1x8x128xf32> to vector<8x128xf32>
    %217 = vector.shape_cast %214 : vector<8x128xf32> to vector<1x8x128xf32>
    tpu.vector_store %arg4[%c10_81, %c0_82, %c0_83], %217 {strides = array<i32>} : memref<16x8x128xf32, #tpu.memory_space<vmem>>, vector<1x8x128xf32>,
    %cst_84 = arith.constant 0.733333349 : f32
    %218 = vector.broadcast %cst_84 : f32 to vector<8x512xf32>
    %219 = arith.cmpf ole, %23, %218 : vector<8x512xf32>
    %cst_85 = arith.constant 0.000000e+00 : f32
    %220 = vector.broadcast %cst_85 : f32 to vector<8x512xf32>
    %221 = arith.select %219, %30, %220 : vector<8x512xi1>, vector<8x512xf32>
    %222 = vector.extract_strided_slice %221 {offsets = [0, 0], sizes = [8, 128], strides = [1, 1]} : vector<8x512xf32> to vector<8x128xf32>
    %223 = vector.extract_strided_slice %221 {offsets = [0, 128], sizes = [8, 128], strides = [1, 1]} : vector<8x512xf32> to vector<8x128xf32>
    %224 = arith.addf %222, %223 : vector<8x128xf32>
    %225 = vector.extract_strided_slice %221 {offsets = [0, 256], sizes = [8, 128], strides = [1, 1]} : vector<8x512xf32> to vector<8x128xf32>
    %226 = arith.addf %224, %225 : vector<8x128xf32>
    %227 = vector.extract_strided_slice %221 {offsets = [0, 384], sizes = [8, 128], strides = [1, 1]} : vector<8x512xf32> to vector<8x128xf32>
    %228 = arith.addf %226, %227 : vector<8x128xf32>
    %c11 = arith.constant 11 : index
    %c0_86 = arith.constant 0 : index
    %c0_87 = arith.constant 0 : index
    %229 = vector.load %arg4[%c11, %c0_86, %c0_87] : memref<16x8x128xf32, #tpu.memory_space<vmem>>, vector<1x8x128xf32>
    %230 = vector.shape_cast %229 : vector<1x8x128xf32> to vector<8x128xf32>
    %231 = arith.addf %230, %228 : vector<8x128xf32>
    %c11_88 = arith.constant 11 : index
    %c0_89 = arith.constant 0 : index
    %c0_90 = arith.constant 0 : index
    %232 = vector.load %arg4[%c11_88, %c0_89, %c0_90] : memref<16x8x128xf32, #tpu.memory_space<vmem>>, vector<1x8x128xf32>
    %233 = vector.shape_cast %232 : vector<1x8x128xf32> to vector<8x128xf32>
    %234 = vector.shape_cast %231 : vector<8x128xf32> to vector<1x8x128xf32>
    tpu.vector_store %arg4[%c11_88, %c0_89, %c0_90], %234 {strides = array<i32>} : memref<16x8x128xf32, #tpu.memory_space<vmem>>, vector<1x8x128xf32>,
    %cst_91 = arith.constant 8.000000e-01 : f32
    %235 = vector.broadcast %cst_91 : f32 to vector<8x512xf32>
    %236 = arith.cmpf ole, %23, %235 : vector<8x512xf32>
    %cst_92 = arith.constant 0.000000e+00 : f32
    %237 = vector.broadcast %cst_92 : f32 to vector<8x512xf32>
    %238 = arith.select %236, %30, %237 : vector<8x512xi1>, vector<8x512xf32>
    %239 = vector.extract_strided_slice %238 {offsets = [0, 0], sizes = [8, 128], strides = [1, 1]} : vector<8x512xf32> to vector<8x128xf32>
    %240 = vector.extract_strided_slice %238 {offsets = [0, 128], sizes = [8, 128], strides = [1, 1]} : vector<8x512xf32> to vector<8x128xf32>
    %241 = arith.addf %239, %240 : vector<8x128xf32>
    %242 = vector.extract_strided_slice %238 {offsets = [0, 256], sizes = [8, 128], strides = [1, 1]} : vector<8x512xf32> to vector<8x128xf32>
    %243 = arith.addf %241, %242 : vector<8x128xf32>
    %244 = vector.extract_strided_slice %238 {offsets = [0, 384], sizes = [8, 128], strides = [1, 1]} : vector<8x512xf32> to vector<8x128xf32>
    %245 = arith.addf %243, %244 : vector<8x128xf32>
    %c12 = arith.constant 12 : index
    %c0_93 = arith.constant 0 : index
    %c0_94 = arith.constant 0 : index
    %246 = vector.load %arg4[%c12, %c0_93, %c0_94] : memref<16x8x128xf32, #tpu.memory_space<vmem>>, vector<1x8x128xf32>
    %247 = vector.shape_cast %246 : vector<1x8x128xf32> to vector<8x128xf32>
    %248 = arith.addf %247, %245 : vector<8x128xf32>
    %c12_95 = arith.constant 12 : index
    %c0_96 = arith.constant 0 : index
    %c0_97 = arith.constant 0 : index
    %249 = vector.load %arg4[%c12_95, %c0_96, %c0_97] : memref<16x8x128xf32, #tpu.memory_space<vmem>>, vector<1x8x128xf32>
    %250 = vector.shape_cast %249 : vector<1x8x128xf32> to vector<8x128xf32>
    %251 = vector.shape_cast %248 : vector<8x128xf32> to vector<1x8x128xf32>
    tpu.vector_store %arg4[%c12_95, %c0_96, %c0_97], %251 {strides = array<i32>} : memref<16x8x128xf32, #tpu.memory_space<vmem>>, vector<1x8x128xf32>,
    %cst_98 = arith.constant 0.866666674 : f32
    %252 = vector.broadcast %cst_98 : f32 to vector<8x512xf32>
    %253 = arith.cmpf ole, %23, %252 : vector<8x512xf32>
    %cst_99 = arith.constant 0.000000e+00 : f32
    %254 = vector.broadcast %cst_99 : f32 to vector<8x512xf32>
    %255 = arith.select %253, %30, %254 : vector<8x512xi1>, vector<8x512xf32>
    %256 = vector.extract_strided_slice %255 {offsets = [0, 0], sizes = [8, 128], strides = [1, 1]} : vector<8x512xf32> to vector<8x128xf32>
    %257 = vector.extract_strided_slice %255 {offsets = [0, 128], sizes = [8, 128], strides = [1, 1]} : vector<8x512xf32> to vector<8x128xf32>
    %258 = arith.addf %256, %257 : vector<8x128xf32>
    %259 = vector.extract_strided_slice %255 {offsets = [0, 256], sizes = [8, 128], strides = [1, 1]} : vector<8x512xf32> to vector<8x128xf32>
    %260 = arith.addf %258, %259 : vector<8x128xf32>
    %261 = vector.extract_strided_slice %255 {offsets = [0, 384], sizes = [8, 128], strides = [1, 1]} : vector<8x512xf32> to vector<8x128xf32>
    %262 = arith.addf %260, %261 : vector<8x128xf32>
    %c13 = arith.constant 13 : index
    %c0_100 = arith.constant 0 : index
    %c0_101 = arith.constant 0 : index
    %263 = vector.load %arg4[%c13, %c0_100, %c0_101] : memref<16x8x128xf32, #tpu.memory_space<vmem>>, vector<1x8x128xf32>
    %264 = vector.shape_cast %263 : vector<1x8x128xf32> to vector<8x128xf32>
    %265 = arith.addf %264, %262 : vector<8x128xf32>
    %c13_102 = arith.constant 13 : index
    %c0_103 = arith.constant 0 : index
    %c0_104 = arith.constant 0 : index
    %266 = vector.load %arg4[%c13_102, %c0_103, %c0_104] : memref<16x8x128xf32, #tpu.memory_space<vmem>>, vector<1x8x128xf32>
    %267 = vector.shape_cast %266 : vector<1x8x128xf32> to vector<8x128xf32>
    %268 = vector.shape_cast %265 : vector<8x128xf32> to vector<1x8x128xf32>
    tpu.vector_store %arg4[%c13_102, %c0_103, %c0_104], %268 {strides = array<i32>} : memref<16x8x128xf32, #tpu.memory_space<vmem>>, vector<1x8x128xf32>,
    %cst_105 = arith.constant 0.933333337 : f32
    %269 = vector.broadcast %cst_105 : f32 to vector<8x512xf32>
    %270 = arith.cmpf ole, %23, %269 : vector<8x512xf32>
    %cst_106 = arith.constant 0.000000e+00 : f32
    %271 = vector.broadcast %cst_106 : f32 to vector<8x512xf32>
    %272 = arith.select %270, %30, %271 : vector<8x512xi1>, vector<8x512xf32>
    %273 = vector.extract_strided_slice %272 {offsets = [0, 0], sizes = [8, 128], strides = [1, 1]} : vector<8x512xf32> to vector<8x128xf32>
    %274 = vector.extract_strided_slice %272 {offsets = [0, 128], sizes = [8, 128], strides = [1, 1]} : vector<8x512xf32> to vector<8x128xf32>
    %275 = arith.addf %273, %274 : vector<8x128xf32>
    %276 = vector.extract_strided_slice %272 {offsets = [0, 256], sizes = [8, 128], strides = [1, 1]} : vector<8x512xf32> to vector<8x128xf32>
    %277 = arith.addf %275, %276 : vector<8x128xf32>
    %278 = vector.extract_strided_slice %272 {offsets = [0, 384], sizes = [8, 128], strides = [1, 1]} : vector<8x512xf32> to vector<8x128xf32>
    %279 = arith.addf %277, %278 : vector<8x128xf32>
    %c14 = arith.constant 14 : index
    %c0_107 = arith.constant 0 : index
    %c0_108 = arith.constant 0 : index
    %280 = vector.load %arg4[%c14, %c0_107, %c0_108] : memref<16x8x128xf32, #tpu.memory_space<vmem>>, vector<1x8x128xf32>
    %281 = vector.shape_cast %280 : vector<1x8x128xf32> to vector<8x128xf32>
    %282 = arith.addf %281, %279 : vector<8x128xf32>
    %c14_109 = arith.constant 14 : index
    %c0_110 = arith.constant 0 : index
    %c0_111 = arith.constant 0 : index
    %283 = vector.load %arg4[%c14_109, %c0_110, %c0_111] : memref<16x8x128xf32, #tpu.memory_space<vmem>>, vector<1x8x128xf32>
    %284 = vector.shape_cast %283 : vector<1x8x128xf32> to vector<8x128xf32>
    %285 = vector.shape_cast %282 : vector<8x128xf32> to vector<1x8x128xf32>
    tpu.vector_store %arg4[%c14_109, %c0_110, %c0_111], %285 {strides = array<i32>} : memref<16x8x128xf32, #tpu.memory_space<vmem>>, vector<1x8x128xf32>,
    %cst_112 = arith.constant 1.000000e+00 : f32
    %286 = vector.broadcast %cst_112 : f32 to vector<8x512xf32>
    %287 = arith.cmpf ole, %23, %286 : vector<8x512xf32>
    %cst_113 = arith.constant 0.000000e+00 : f32
    %288 = vector.broadcast %cst_113 : f32 to vector<8x512xf32>
    %289 = arith.select %287, %30, %288 : vector<8x512xi1>, vector<8x512xf32>
    %290 = vector.extract_strided_slice %289 {offsets = [0, 0], sizes = [8, 128], strides = [1, 1]} : vector<8x512xf32> to vector<8x128xf32>
    %291 = vector.extract_strided_slice %289 {offsets = [0, 128], sizes = [8, 128], strides = [1, 1]} : vector<8x512xf32> to vector<8x128xf32>
    %292 = arith.addf %290, %291 : vector<8x128xf32>
    %293 = vector.extract_strided_slice %289 {offsets = [0, 256], sizes = [8, 128], strides = [1, 1]} : vector<8x512xf32> to vector<8x128xf32>
    %294 = arith.addf %292, %293 : vector<8x128xf32>
    %295 = vector.extract_strided_slice %289 {offsets = [0, 384], sizes = [8, 128], strides = [1, 1]} : vector<8x512xf32> to vector<8x128xf32>
    %296 = arith.addf %294, %295 : vector<8x128xf32>
    %c15 = arith.constant 15 : index
    %c0_114 = arith.constant 0 : index
    %c0_115 = arith.constant 0 : index
    %297 = vector.load %arg4[%c15, %c0_114, %c0_115] : memref<16x8x128xf32, #tpu.memory_space<vmem>>, vector<1x8x128xf32>
    %298 = vector.shape_cast %297 : vector<1x8x128xf32> to vector<8x128xf32>
    %299 = arith.addf %298, %296 : vector<8x128xf32>
    %c15_116 = arith.constant 15 : index
    %c0_117 = arith.constant 0 : index
    %c0_118 = arith.constant 0 : index
    %300 = vector.load %arg4[%c15_116, %c0_117, %c0_118] : memref<16x8x128xf32, #tpu.memory_space<vmem>>, vector<1x8x128xf32>
    %301 = vector.shape_cast %300 : vector<1x8x128xf32> to vector<8x128xf32>
    %302 = vector.shape_cast %299 : vector<8x128xf32> to vector<1x8x128xf32>
    tpu.vector_store %arg4[%c15_116, %c0_117, %c0_118], %302 {strides = array<i32>} : memref<16x8x128xf32, #tpu.memory_space<vmem>>, vector<1x8x128xf32>,
    %c1_i32 = arith.constant 1 : i32
    %303 = arith.cmpi eq, %arg0, %c1_i32 : i32
    %304 = arith.extui %303 : i1 to i32
    %c0_i32_119 = arith.constant 0 : i32
    %305 = arith.cmpi ne, %304, %c0_i32_119 : i32
    scf.if %305 {
      %cst_120 = arith.constant 0.000000e+00 : f32
      %306 = vector.broadcast %cst_120 : f32 to vector<8x1xf32>
      %c0_121 = arith.constant 0 : index
      %c0_122 = arith.constant 0 : index
      %c0_123 = arith.constant 0 : index
      %307 = vector.load %arg4[%c0_121, %c0_122, %c0_123] : memref<16x8x128xf32, #tpu.memory_space<vmem>>, vector<1x8x128xf32>
      %308 = vector.shape_cast %307 : vector<1x8x128xf32> to vector<8x128xf32>
      %cst_124 = arith.constant dense<0.000000e+00> : vector<8xf32>
      %309 = vector.multi_reduction <add>, %308, %cst_124 [1] : vector<8x128xf32> to vector<8xf32>
      %310 = vector.shape_cast %309 : vector<8xf32> to vector<8x1xf32>
      %c1_125 = arith.constant 1 : index
      %c0_126 = arith.constant 0 : index
      %c0_127 = arith.constant 0 : index
      %311 = vector.load %arg4[%c1_125, %c0_126, %c0_127] : memref<16x8x128xf32, #tpu.memory_space<vmem>>, vector<1x8x128xf32>
      %312 = vector.shape_cast %311 : vector<1x8x128xf32> to vector<8x128xf32>
      %cst_128 = arith.constant dense<0.000000e+00> : vector<8xf32>
      %313 = vector.multi_reduction <add>, %312, %cst_128 [1] : vector<8x128xf32> to vector<8xf32>
      %314 = vector.shape_cast %313 : vector<8xf32> to vector<8x1xf32>
      %315 = arith.subf %314, %310 : vector<8x1xf32>
      %316 = math.absf %315 : vector<8x1xf32>
      %317 = arith.addf %306, %316 : vector<8x1xf32>
      %c2_129 = arith.constant 2 : index
      %c0_130 = arith.constant 0 : index
      %c0_131 = arith.constant 0 : index
      %318 = vector.load %arg4[%c2_129, %c0_130, %c0_131] : memref<16x8x128xf32, #tpu.memory_space<vmem>>, vector<1x8x128xf32>
      %319 = vector.shape_cast %318 : vector<1x8x128xf32> to vector<8x128xf32>
      %cst_132 = arith.constant dense<0.000000e+00> : vector<8xf32>
      %320 = vector.multi_reduction <add>, %319, %cst_132 [1] : vector<8x128xf32> to vector<8xf32>
      %321 = vector.shape_cast %320 : vector<8xf32> to vector<8x1xf32>
      %322 = arith.subf %321, %314 : vector<8x1xf32>
      %323 = math.absf %322 : vector<8x1xf32>
      %324 = arith.addf %317, %323 : vector<8x1xf32>
      %c3_133 = arith.constant 3 : index
      %c0_134 = arith.constant 0 : index
      %c0_135 = arith.constant 0 : index
      %325 = vector.load %arg4[%c3_133, %c0_134, %c0_135] : memref<16x8x128xf32, #tpu.memory_space<vmem>>, vector<1x8x128xf32>
      %326 = vector.shape_cast %325 : vector<1x8x128xf32> to vector<8x128xf32>
      %cst_136 = arith.constant dense<0.000000e+00> : vector<8xf32>
      %327 = vector.multi_reduction <add>, %326, %cst_136 [1] : vector<8x128xf32> to vector<8xf32>
      %328 = vector.shape_cast %327 : vector<8xf32> to vector<8x1xf32>
      %329 = arith.subf %328, %321 : vector<8x1xf32>
      %330 = math.absf %329 : vector<8x1xf32>
      %331 = arith.addf %324, %330 : vector<8x1xf32>
      %c4_137 = arith.constant 4 : index
      %c0_138 = arith.constant 0 : index
      %c0_139 = arith.constant 0 : index
      %332 = vector.load %arg4[%c4_137, %c0_138, %c0_139] : memref<16x8x128xf32, #tpu.memory_space<vmem>>, vector<1x8x128xf32>
      %333 = vector.shape_cast %332 : vector<1x8x128xf32> to vector<8x128xf32>
      %cst_140 = arith.constant dense<0.000000e+00> : vector<8xf32>
      %334 = vector.multi_reduction <add>, %333, %cst_140 [1] : vector<8x128xf32> to vector<8xf32>
      %335 = vector.shape_cast %334 : vector<8xf32> to vector<8x1xf32>
      %336 = arith.subf %335, %328 : vector<8x1xf32>
      %337 = math.absf %336 : vector<8x1xf32>
      %338 = arith.addf %331, %337 : vector<8x1xf32>
      %c5_141 = arith.constant 5 : index
      %c0_142 = arith.constant 0 : index
      %c0_143 = arith.constant 0 : index
      %339 = vector.load %arg4[%c5_141, %c0_142, %c0_143] : memref<16x8x128xf32, #tpu.memory_space<vmem>>, vector<1x8x128xf32>
      %340 = vector.shape_cast %339 : vector<1x8x128xf32> to vector<8x128xf32>
      %cst_144 = arith.constant dense<0.000000e+00> : vector<8xf32>
      %341 = vector.multi_reduction <add>, %340, %cst_144 [1] : vector<8x128xf32> to vector<8xf32>
      %342 = vector.shape_cast %341 : vector<8xf32> to vector<8x1xf32>
      %343 = arith.subf %342, %335 : vector<8x1xf32>
      %344 = math.absf %343 : vector<8x1xf32>
      %345 = arith.addf %338, %344 : vector<8x1xf32>
      %c6_145 = arith.constant 6 : index
      %c0_146 = arith.constant 0 : index
      %c0_147 = arith.constant 0 : index
      %346 = vector.load %arg4[%c6_145, %c0_146, %c0_147] : memref<16x8x128xf32, #tpu.memory_space<vmem>>, vector<1x8x128xf32>
      %347 = vector.shape_cast %346 : vector<1x8x128xf32> to vector<8x128xf32>
      %cst_148 = arith.constant dense<0.000000e+00> : vector<8xf32>
      %348 = vector.multi_reduction <add>, %347, %cst_148 [1] : vector<8x128xf32> to vector<8xf32>
      %349 = vector.shape_cast %348 : vector<8xf32> to vector<8x1xf32>
      %350 = arith.subf %349, %342 : vector<8x1xf32>
      %351 = math.absf %350 : vector<8x1xf32>
      %352 = arith.addf %345, %351 : vector<8x1xf32>
      %c7_149 = arith.constant 7 : index
      %c0_150 = arith.constant 0 : index
      %c0_151 = arith.constant 0 : index
      %353 = vector.load %arg4[%c7_149, %c0_150, %c0_151] : memref<16x8x128xf32, #tpu.memory_space<vmem>>, vector<1x8x128xf32>
      %354 = vector.shape_cast %353 : vector<1x8x128xf32> to vector<8x128xf32>
      %cst_152 = arith.constant dense<0.000000e+00> : vector<8xf32>
      %355 = vector.multi_reduction <add>, %354, %cst_152 [1] : vector<8x128xf32> to vector<8xf32>
      %356 = vector.shape_cast %355 : vector<8xf32> to vector<8x1xf32>
      %357 = arith.subf %356, %349 : vector<8x1xf32>
      %358 = math.absf %357 : vector<8x1xf32>
      %359 = arith.addf %352, %358 : vector<8x1xf32>
      %c8_153 = arith.constant 8 : index
      %c0_154 = arith.constant 0 : index
      %c0_155 = arith.constant 0 : index
      %360 = vector.load %arg4[%c8_153, %c0_154, %c0_155] : memref<16x8x128xf32, #tpu.memory_space<vmem>>, vector<1x8x128xf32>
      %361 = vector.shape_cast %360 : vector<1x8x128xf32> to vector<8x128xf32>
      %cst_156 = arith.constant dense<0.000000e+00> : vector<8xf32>
      %362 = vector.multi_reduction <add>, %361, %cst_156 [1] : vector<8x128xf32> to vector<8xf32>
      %363 = vector.shape_cast %362 : vector<8xf32> to vector<8x1xf32>
      %364 = arith.subf %363, %356 : vector<8x1xf32>
      %365 = math.absf %364 : vector<8x1xf32>
      %366 = arith.addf %359, %365 : vector<8x1xf32>
      %c9_157 = arith.constant 9 : index
      %c0_158 = arith.constant 0 : index
      %c0_159 = arith.constant 0 : index
      %367 = vector.load %arg4[%c9_157, %c0_158, %c0_159] : memref<16x8x128xf32, #tpu.memory_space<vmem>>, vector<1x8x128xf32>
      %368 = vector.shape_cast %367 : vector<1x8x128xf32> to vector<8x128xf32>
      %cst_160 = arith.constant dense<0.000000e+00> : vector<8xf32>
      %369 = vector.multi_reduction <add>, %368, %cst_160 [1] : vector<8x128xf32> to vector<8xf32>
      %370 = vector.shape_cast %369 : vector<8xf32> to vector<8x1xf32>
      %371 = arith.subf %370, %363 : vector<8x1xf32>
      %372 = math.absf %371 : vector<8x1xf32>
      %373 = arith.addf %366, %372 : vector<8x1xf32>
      %c10_161 = arith.constant 10 : index
      %c0_162 = arith.constant 0 : index
      %c0_163 = arith.constant 0 : index
      %374 = vector.load %arg4[%c10_161, %c0_162, %c0_163] : memref<16x8x128xf32, #tpu.memory_space<vmem>>, vector<1x8x128xf32>
      %375 = vector.shape_cast %374 : vector<1x8x128xf32> to vector<8x128xf32>
      %cst_164 = arith.constant dense<0.000000e+00> : vector<8xf32>
      %376 = vector.multi_reduction <add>, %375, %cst_164 [1] : vector<8x128xf32> to vector<8xf32>
      %377 = vector.shape_cast %376 : vector<8xf32> to vector<8x1xf32>
      %378 = arith.subf %377, %370 : vector<8x1xf32>
      %379 = math.absf %378 : vector<8x1xf32>
      %380 = arith.addf %373, %379 : vector<8x1xf32>
      %c11_165 = arith.constant 11 : index
      %c0_166 = arith.constant 0 : index
      %c0_167 = arith.constant 0 : index
      %381 = vector.load %arg4[%c11_165, %c0_166, %c0_167] : memref<16x8x128xf32, #tpu.memory_space<vmem>>, vector<1x8x128xf32>
      %382 = vector.shape_cast %381 : vector<1x8x128xf32> to vector<8x128xf32>
      %cst_168 = arith.constant dense<0.000000e+00> : vector<8xf32>
      %383 = vector.multi_reduction <add>, %382, %cst_168 [1] : vector<8x128xf32> to vector<8xf32>
      %384 = vector.shape_cast %383 : vector<8xf32> to vector<8x1xf32>
      %385 = arith.subf %384, %377 : vector<8x1xf32>
      %386 = math.absf %385 : vector<8x1xf32>
      %387 = arith.addf %380, %386 : vector<8x1xf32>
      %c12_169 = arith.constant 12 : index
      %c0_170 = arith.constant 0 : index
      %c0_171 = arith.constant 0 : index
      %388 = vector.load %arg4[%c12_169, %c0_170, %c0_171] : memref<16x8x128xf32, #tpu.memory_space<vmem>>, vector<1x8x128xf32>
      %389 = vector.shape_cast %388 : vector<1x8x128xf32> to vector<8x128xf32>
      %cst_172 = arith.constant dense<0.000000e+00> : vector<8xf32>
      %390 = vector.multi_reduction <add>, %389, %cst_172 [1] : vector<8x128xf32> to vector<8xf32>
      %391 = vector.shape_cast %390 : vector<8xf32> to vector<8x1xf32>
      %392 = arith.subf %391, %384 : vector<8x1xf32>
      %393 = math.absf %392 : vector<8x1xf32>
      %394 = arith.addf %387, %393 : vector<8x1xf32>
      %c13_173 = arith.constant 13 : index
      %c0_174 = arith.constant 0 : index
      %c0_175 = arith.constant 0 : index
      %395 = vector.load %arg4[%c13_173, %c0_174, %c0_175] : memref<16x8x128xf32, #tpu.memory_space<vmem>>, vector<1x8x128xf32>
      %396 = vector.shape_cast %395 : vector<1x8x128xf32> to vector<8x128xf32>
      %cst_176 = arith.constant dense<0.000000e+00> : vector<8xf32>
      %397 = vector.multi_reduction <add>, %396, %cst_176 [1] : vector<8x128xf32> to vector<8xf32>
      %398 = vector.shape_cast %397 : vector<8xf32> to vector<8x1xf32>
      %399 = arith.subf %398, %391 : vector<8x1xf32>
      %400 = math.absf %399 : vector<8x1xf32>
      %401 = arith.addf %394, %400 : vector<8x1xf32>
      %c14_177 = arith.constant 14 : index
      %c0_178 = arith.constant 0 : index
      %c0_179 = arith.constant 0 : index
      %402 = vector.load %arg4[%c14_177, %c0_178, %c0_179] : memref<16x8x128xf32, #tpu.memory_space<vmem>>, vector<1x8x128xf32>
      %403 = vector.shape_cast %402 : vector<1x8x128xf32> to vector<8x128xf32>
      %cst_180 = arith.constant dense<0.000000e+00> : vector<8xf32>
      %404 = vector.multi_reduction <add>, %403, %cst_180 [1] : vector<8x128xf32> to vector<8xf32>
      %405 = vector.shape_cast %404 : vector<8xf32> to vector<8x1xf32>
      %406 = arith.subf %405, %398 : vector<8x1xf32>
      %407 = math.absf %406 : vector<8x1xf32>
      %408 = arith.addf %401, %407 : vector<8x1xf32>
      %c15_181 = arith.constant 15 : index
      %c0_182 = arith.constant 0 : index
      %c0_183 = arith.constant 0 : index
      %409 = vector.load %arg4[%c15_181, %c0_182, %c0_183] : memref<16x8x128xf32, #tpu.memory_space<vmem>>, vector<1x8x128xf32>
      %410 = vector.shape_cast %409 : vector<1x8x128xf32> to vector<8x128xf32>
      %cst_184 = arith.constant dense<0.000000e+00> : vector<8xf32>
      %411 = vector.multi_reduction <add>, %410, %cst_184 [1] : vector<8x128xf32> to vector<8xf32>
      %412 = vector.shape_cast %411 : vector<8xf32> to vector<8x1xf32>
      %413 = arith.subf %412, %405 : vector<8x1xf32>
      %414 = math.absf %413 : vector<8x1xf32>
      %415 = arith.addf %408, %414 : vector<8x1xf32>
      %cst_185 = arith.constant 0.00166666671 : f32
      %416 = vector.broadcast %cst_185 : f32 to vector<8x1xf32>
      %417 = arith.mulf %415, %416 : vector<8x1xf32>
      %c0_186 = arith.constant 0 : index
      %c0_187 = arith.constant 0 : index
      %418 = vector.load %arg3[%c0_186, %c0_187] : memref<8x1xf32, #tpu.memory_space<vmem>>, vector<8x1xf32>
      tpu.vector_store %arg3[%c0_186, %c0_187], %417 {strides = array<i32>} : memref<8x1xf32, #tpu.memory_space<vmem>>, vector<8x1xf32>,
    } else {
    }
    return
  }
  func.func @transform_0(%arg0: i32) -> (i32, i32) {
    %c0_i32 = arith.constant 0 : i32
    %c0_i32_0 = arith.constant 0 : i32
    return %c0_i32, %arg0 : i32, i32
  }
  func.func @transform_1(%arg0: i32) -> (i32, i32) {
    %c0_i32 = arith.constant 0 : i32
    %c0_i32_0 = arith.constant 0 : i32
    return %c0_i32, %arg0 : i32, i32
  }
  func.func @transform_2(%arg0: i32) -> (i32, i32) {
    %c0_i32 = arith.constant 0 : i32
    %c0_i32_0 = arith.constant 0 : i32
    %c0_i32_1 = arith.constant 0 : i32
    return %c0_i32, %c0_i32_0 : i32, i32
  }
}

</mosaic_0001>

<llo_original>
// kernel: _lambda_.1
$region0: #{_lambda_.1}
  #allocation0 [shape = 'u32[]', space=smem, size = 0x4, offset = 0x4, fixed_abs, tag = 'smem constant byte address 0x4 - core index']
  #allocation1 [shape = 'u32[144,128]{1,0:T(1,128)}', space=vmem, size = 0x12000, scoped, tag = 'internal scratch']
  #allocation2 [shape = 'f32[16,8,128]{2,1,0:T(8,128)}', space=vmem, size = 0x10000, scoped, tag = 'scratch operand']
  %s0 = inlined_call_operand.hbm [shape: f32[8,600], index: 0, kind: input, shape index: {}]
  %s1 = inlined_call_operand.vmem [shape: s32[1,600], index: 1, kind: input, shape index: {}]
  %s2 = inlined_call_operand.vmem [shape: f32[8,1], index: 2, kind: output, shape index: {}]
  %s3 = sld [smem:[#allocation0]]
  $region53: #{_lambda_.1} parent=0
    _
  %s5 = ssub.s32 1, %s3
  %s6 = scalar_select 0, %s5, %s3
  $region1: #{_lambda_.1} parent=0
    #allocation3 [shape = 'u8[32768]{0}', space=vmem, size = 0x8000, scoped, tag = 'input window, operand 0']
    #allocation4 [shape = 's32[2]{0}', space=sflag, size = 0x8, scoped, tag = 'scoped memory for _lambda_.1']
    %7 = vsyncpa [#allocation4], 0
    %s8 = scalar_lea.sflag [#allocation4], 1
    %9 = vsyncpa %s8, 0
    loop: start=0, step=1, limit=4
    $region2: #{_lambda_.1} parent=1 // loop_pre_header
      _
    $region3: #{_lambda_.1} parent=1 // loop_header
      %s11 = sphi 0, %s15
      %p12 = scmp.ge.s32.totalorder %s11, 4
      %s21 = sphi 0, %s23
      %s24 = sphi 0, %s21
      %s25 = sphi 0, %s24
      %s41 = sphi 0, %s25
      %s47 = sphi 0, %s49
      %s50 = sphi 0, %s47
      %s51 = sphi 0, %s50
      %s67 = sphi 0, %s51
      %s71 = sphi 0, %s71
      %s73 = sphi 0, %s71
      %s74 = sphi 0, %s73
      %s88 = sphi 0, %s74
    $region4: #{_lambda_.1} parent=1 // loop_header_branch
      %14 = sbr.rel (%p12) target = $region8
    $region5: #{_lambda_.1} parent=1 // loop_body
      %s16 = ssub.s32 %s11, 1
      %s17 = ssub.s32 %s11, 2
      %s18 = sadd.s32 %s11, 1
      %s19 = ssub.s32 %s11, %s18
      %p20 = scmp.eq.s32.totalorder %s19, 0
      %s22 = sadd.s32 %s21, 1
      %s23 = scalar_select %p20, %s21, %s22
      %p26 = pneg %p20
      %p27 = scmp.eq.s32.totalorder %s11, 1
      %p28 = por %p26, %p27
      %p29 = scmp.ne.s32.totalorder %s21, %s24
      %p30 = scmp.eq.s32.totalorder %s11, 0
      %p31 = por %p29, %p30
      %p32 = scmp.ne.s32.totalorder %s21, %s24
      %p33 = scmp.eq.s32.totalorder %s16, 1
      %p34 = por %p32, %p33
      %p35 = scmp.ne.s32.totalorder %s24, %s25
      %p36 = scmp.eq.s32.totalorder %s16, 0
      %p37 = por %p35, %p36
      %p38 = scmp.ne.s32.totalorder %s24, %s25
      %p39 = scmp.eq.s32.totalorder %s17, 1
      %p40 = por %p38, %p39
      %p42 = scmp.ne.s32.totalorder %s25, %s41
      %p43 = scmp.eq.s32.totalorder %s17, 0
      %p44 = por %p42, %p43
      %s45 = ssub.s32 %s11, %s18
      %p46 = scmp.eq.s32.totalorder %s45, 0
      %s48 = sadd.s32 %s47, 1
      %s49 = scalar_select %p46, %s47, %s48
      %p52 = pneg %p46
      %p53 = scmp.eq.s32.totalorder %s11, 1
      %p54 = por %p52, %p53
      %p55 = scmp.ne.s32.totalorder %s47, %s50
      %p56 = scmp.eq.s32.totalorder %s11, 0
      %p57 = por %p55, %p56
      %p58 = scmp.ne.s32.totalorder %s47, %s50
      %p59 = scmp.eq.s32.totalorder %s16, 1
      %p60 = por %p58, %p59
      %p61 = scmp.ne.s32.totalorder %s50, %s51
      %p62 = scmp.eq.s32.totalorder %s16, 0
      %p63 = por %p61, %p62
      %p64 = scmp.ne.s32.totalorder %s50, %s51
      %p65 = scmp.eq.s32.totalorder %s17, 1
      %p66 = por %p64, %p65
      %p68 = scmp.ne.s32.totalorder %s51, %s67
      %p69 = scmp.eq.s32.totalorder %s17, 0
      %p70 = por %p68, %p69
      %s72 = sadd.s32 %s71, 1
      %p75 = scmp.eq.s32.totalorder %s11, 1
      %p76 = scmp.ne.s32.totalorder %s71, %s73
      %p77 = scmp.eq.s32.totalorder %s11, 0
      %p78 = por %p76, %p77
      %p79 = scmp.ne.s32.totalorder %s71, %s73
      %p80 = scmp.eq.s32.totalorder %s16, 1
      %p81 = por %p79, %p80
      %p82 = scmp.ne.s32.totalorder %s73, %s74
      %p83 = scmp.eq.s32.totalorder %s16, 0
      %p84 = por %p82, %p83
      %p85 = scmp.ne.s32.totalorder %s73, %s74
      %p86 = scmp.eq.s32.totalorder %s17, 1
      %p87 = por %p85, %p86
      %p89 = scmp.ne.s32.totalorder %s74, %s88
      %p90 = scmp.eq.s32.totalorder %s17, 0
      %p91 = por %p89, %p90
      %p92 = scmp.le.s32.totalorder 1, %s11
      %p93 = scmp.lt.s32.totalorder %s11, 3
      %p94 = pnand %p92, %p93
      %p95 = pneg %p94
      // Predicated region
      $region9: #{_lambda_.1} parent=5 // pred_check
        _
      $region10: #{_lambda_.1} parent=5 // pred_check_branch
        %97 = sbr.rel (%p94) target = $region12
      $region11: #{_lambda_.1} parent=5 // pred_region
        %s98 = ssub.s32 %s11, 1
      $region12: #{_lambda_.1} parent=5 // pred_fallthru
        _
      %p99 = scmp.lt.s32.totalorder %s11, 2
      // Predicated region
      $region13: #{_lambda_.1} parent=5 // pred_check
        %p100 = pneg %p99
      $region14: #{_lambda_.1} parent=5 // pred_check_branch
        %102 = sbr.rel (%p100) target = $region16
      $region15: #{_lambda_.1} parent=5 // pred_region
        // Predicated region
        $region17: #{_lambda_.1} parent=15 // pred_check
          %p103 = pneg %p31
        $region18: #{_lambda_.1} parent=15 // pred_check_branch
          %105 = sbr.rel (%p103) target = $region20
        $region19: #{_lambda_.1} parent=15 // pred_region
          %s106 = sand.u32 %s21, 1
          %s107 = scalar_lea.sflag [#allocation4], %s106
          %s108 = sand.u32 %s21, 1
          %s109 = smul.addr %s108, 32
          %s110 = scalar_lea.vmem [#allocation3], %s109
          %s111 = smul.u32 4, %s11
          %s112 = ssub.s32 5, %s111
          %p113 = scmp.lt.s32.totalorder %s112, 4
          %s114 = scalar_select %p113, %s112, 4
          %s115 = smul.u32 128, %s114
          %s117 = ssub.s32 512, %s115
          %118 = vsyncadd %s107, %s117
          %p119 = scmp.ne.s32.totalorder 0, %s115
          %s120 = smul.addr %s111, 128
          %s121 = scalar_lea.hbm %s0, %s120
          %s122 = smul.u32 %s114, 8
          %s123 = sshll.u32 %s122, 4
          %s124 = sshll.u32 %s110, 4
          %s125 = int_to_ptr.vmem [resolvable:$true] %s124
          %127 = dma.hbm_to_vmem [thread:$0]  (%p119), %s121, %s123, %s125, %s107
        $region20: #{_lambda_.1} parent=15 // pred_fallthru
          _
        // Predicated region
        $region21: #{_lambda_.1} parent=15 // pred_check
          %p128 = pneg %p57
        $region22: #{_lambda_.1} parent=15 // pred_check_branch
          %130 = sbr.rel (%p128) target = $region24
        $region23: #{_lambda_.1} parent=15 // pred_region
          %s131 = smul.u32 4, %s11
          %s132 = ssub.s32 5, %s131
          %p133 = scmp.lt.s32.totalorder %s132, 4
          %s134 = scalar_select %p133, %s132, 4
          %s135 = smul.u32 16, %s134
          %p136 = scmp.lt.s32.totalorder %s131, 4
          %s137 = scalar_select %p136, %s131, 4
          %s138 = scalar_lea.vmem %s1, %s137
          %s139 = smul.u32 4, %s11
          %s140 = ssub.s32 5, %s139
          %p141 = scmp.lt.s32.totalorder %s140, 4
          %s142 = scalar_select %p141, %s140, 4
          %s143 = smul.u32 16, %s142
        $region24: #{_lambda_.1} parent=15 // pred_fallthru
          _
      $region16: #{_lambda_.1} parent=5 // pred_fallthru
        _
      %p144 = scmp.le.s32.totalorder 1, %s11
      %p145 = scmp.lt.s32.totalorder %s11, 3
      %p146 = pnand %p144, %p145
      %p147 = pneg %p146
      // Predicated region
      $region25: #{_lambda_.1} parent=5 // pred_check
        _
      $region26: #{_lambda_.1} parent=5 // pred_check_branch
        %149 = sbr.rel (%p146) target = $region28
      $region27: #{_lambda_.1} parent=5 // pred_region
        %s150 = ssub.s32 %s11, 1
        %s151 = sand.u32 %s24, 1
        %s152 = scalar_lea.sflag [#allocation4], %s151
        %s153 = sand.u32 %s24, 1
        %s154 = smul.addr %s153, 32
        %s155 = scalar_lea.vmem [#allocation3], %s154
        // Predicated region
        $region29: #{_lambda_.1} parent=27 // pred_check
          %p156 = pneg %p37
        $region30: #{_lambda_.1} parent=27 // pred_check_branch
          %158 = sbr.rel (%p156) target = $region32
        $region31: #{_lambda_.1} parent=27 // pred_region
          %159 = dma.done %s152, 512
        $region32: #{_lambda_.1} parent=27 // pred_fallthru
          _
        %s160 = sand.u32 %s24, 1
        %s161 = scalar_lea.sflag [#allocation4], %s160
        %s162 = sand.u32 %s24, 1
        %s163 = smul.addr %s162, 32
        %s164 = scalar_lea.vmem [#allocation3], %s163
        %p165 = pneg %p37
        %p166 = pneg %p34
        %s167 = smul.u32 4, %s16
        %s168 = ssub.s32 5, %s167
        %p169 = scmp.lt.s32.totalorder %s168, 4
        %s170 = scalar_select %p169, %s168, 4
        %s171 = smul.u32 16, %s170
        %p172 = scmp.lt.s32.totalorder %s167, 4
        %s173 = scalar_select %p172, %s167, 4
        %s174 = scalar_lea.vmem %s1, %s173
        %p175 = pneg %p63
        %p176 = pneg %p60
        %p177 = pneg %p84
        %p178 = pneg %p81
        %s179 = smul.u32 4, %s16
        %s180 = ssub.s32 5, %s179
        %p181 = scmp.lt.s32.totalorder %s180, 4
        %s182 = scalar_select %p181, %s180, 4
        %s183 = smul.u32 128, %s182
        %s184 = smul.u32 4, %s16
        %s185 = ssub.s32 5, %s184
        %p186 = scmp.lt.s32.totalorder %s185, 4
        %s187 = scalar_select %p186, %s185, 4
        %s188 = smul.u32 16, %s187
        %p189 = scmp.lt.s32.totalorder %s184, 4
        %s190 = scalar_select %p189, %s184, 4
        %s191 = scalar_lea.vmem %s1, %s190
        %s192 = smul.u32 4, %s16
        %s193 = ssub.s32 5, %s192
        %p194 = scmp.lt.s32.totalorder %s193, 4
        %s195 = scalar_select %p194, %s193, 4
        %s196 = smul.u32 16, %s195
        %p197 = scmp.eq.s32.totalorder %s16, 0
        // Predicated region
        $region33: #{_lambda_.1} parent=27 // pred_check
          %p198 = pneg %p197
        $region34: #{_lambda_.1} parent=27 // pred_check_branch
          %200 = sbr.rel (%p198) target = $region36
        $region35: #{_lambda_.1} parent=27 // pred_region
          %201 = vst [vmem:[#allocation2] sm:$0xff] 0.0
          %202 = vst [vmem:[#allocation2 + $0x8] sm:$0xff] 0.0
          %203 = vst [vmem:[#allocation2 + $0x10] sm:$0xff] 0.0
          %204 = vst [vmem:[#allocation2 + $0x18] sm:$0xff] 0.0
          %205 = vst [vmem:[#allocation2 + $0x20] sm:$0xff] 0.0
          %206 = vst [vmem:[#allocation2 + $0x28] sm:$0xff] 0.0
          %207 = vst [vmem:[#allocation2 + $0x30] sm:$0xff] 0.0
          %208 = vst [vmem:[#allocation2 + $0x38] sm:$0xff] 0.0
          %209 = vst [vmem:[#allocation2 + $0x40] sm:$0xff] 0.0
          %210 = vst [vmem:[#allocation2 + $0x48] sm:$0xff] 0.0
          %211 = vst [vmem:[#allocation2 + $0x50] sm:$0xff] 0.0
          %212 = vst [vmem:[#allocation2 + $0x58] sm:$0xff] 0.0
          %213 = vst [vmem:[#allocation2 + $0x60] sm:$0xff] 0.0
          %214 = vst [vmem:[#allocation2 + $0x68] sm:$0xff] 0.0
          %215 = vst [vmem:[#allocation2 + $0x70] sm:$0xff] 0.0
          %216 = vst [vmem:[#allocation2 + $0x78] sm:$0xff] 0.0
        $region36: #{_lambda_.1} parent=27 // pred_fallthru
          _
        %v217 = vld [vmem:[%s155] sm:$0xff]
        %v218 = vld [vmem:[%s155 + $0x8] sm:$0xff]
        %v219 = vld [vmem:[%s155 + $0x10] sm:$0xff]
        %v220 = vld [vmem:[%s155 + $0x18] sm:$0xff]
        %v221 = vrot.slane %v217, 4
        %v222 = vmax.f32 %v217, %v221
        %v223 = vrot.slane %v222, 2
        %v224 = vmax.f32 %v222, %v223
        %v225 = vrot.slane %v224, 1
        %v226 = vmax.f32 %v224, %v225
        %v227 = vrot.slane %v218, 4
        %v228 = vmax.f32 %v218, %v227
        %v229 = vrot.slane %v228, 2
        %v230 = vmax.f32 %v228, %v229
        %v231 = vrot.slane %v230, 1
        %v232 = vmax.f32 %v230, %v231
        %v233 = vrot.slane %v219, 4
        %v234 = vmax.f32 %v219, %v233
        %v235 = vrot.slane %v234, 2
        %v236 = vmax.f32 %v234, %v235
        %v237 = vrot.slane %v236, 1
        %v238 = vmax.f32 %v236, %v237
        %v239 = vrot.slane %v220, 4
        %v240 = vmax.f32 %v220, %v239
        %v241 = vrot.slane %v240, 2
        %v242 = vmax.f32 %v240, %v241
        %v243 = vrot.slane %v242, 1
        %v244 = vmax.f32 %v242, %v243
        %v245 = vsub.f32 %v217, %v226
        %v246 = vsub.f32 %v218, %v232
        %v247 = vsub.f32 %v219, %v238
        %v248 = vsub.f32 %v220, %v244
        %v249 = vmul.f32 %v245, 1.442695
        %v250 = vpow.pop %v249
        %v251 = vmul.f32 %v246, 1.442695
        %v252 = vpow.pop %v251
        %v253 = vmul.f32 %v247, 1.442695
        %v254 = vpow.pop %v253
        %v255 = vmul.f32 %v248, 1.442695
        %v256 = vpow.pop %v255
        %v257 = vrot.slane %v250, 4
        %v258 = vadd.f32 %v250, %v257
        %v259 = vrot.slane %v258, 2
        %v260 = vadd.f32 %v258, %v259
        %v261 = vrot.slane %v260, 1
        %v262 = vadd.f32 %v260, %v261
        %v263 = vrot.slane %v252, 4
        %v264 = vadd.f32 %v252, %v263
        %v265 = vrot.slane %v264, 2
        %v266 = vadd.f32 %v264, %v265
        %v267 = vrot.slane %v266, 1
        %v268 = vadd.f32 %v266, %v267
        %v269 = vrot.slane %v254, 4
        %v270 = vadd.f32 %v254, %v269
        %v271 = vrot.slane %v270, 2
        %v272 = vadd.f32 %v270, %v271
        %v273 = vrot.slane %v272, 1
        %v274 = vadd.f32 %v272, %v273
        %v275 = vrot.slane %v256, 4
        %v276 = vadd.f32 %v256, %v275
        %v277 = vrot.slane %v276, 2
        %v278 = vadd.f32 %v276, %v277
        %v279 = vrot.slane %v278, 1
        %v280 = vadd.f32 %v278, %v279
        %v281 = vrcp.pop %v262
        %v282 = vrcp.pop %v268
        %v283 = vrcp.pop %v274
        %v284 = vrcp.pop %v280
        %v285 = vmul.f32 %v250, %v281
        %v286 = vmul.f32 %v252, %v282
        %v287 = vmul.f32 %v254, %v283
        %v288 = vmul.f32 %v256, %v284
        %s289 = smul.u32 %s16, 512
        %v290 = vlaneseq
        %v291 = vand.u32 %v290, 127
        %v292 = vadd.s32 %v291, 128
        %v293 = vadd.s32 %v291, 256
        %v294 = vadd.s32 %v291, 384
        %v295 = vstv %s289
        %v296 = vadd.s32 %v295, %v291
        %v297 = vadd.s32 %v295, %v292
        %v298 = vadd.s32 %v295, %v293
        %v299 = vadd.s32 %v295, %v294
        %vm300 = vcmp.lt.s32.totalorder %v296, 600
        %vm301 = vcmp.lt.s32.totalorder %v297, 600
        %vm302 = vcmp.lt.s32.totalorder %v298, 600
        %vm303 = vcmp.lt.s32.totalorder %v299, 600
        %v304 = vsel %vm300, 1, 0
        %v305 = vsel %vm301, 1, 0
        %v306 = vsel %vm302, 1, 0
        %v307 = vsel %vm303, 1, 0
        %vm308 = vcmp.eq.s32.totalorder %v304, 1
        %vm309 = vcmp.eq.s32.totalorder %v305, 1
        %vm310 = vcmp.eq.s32.totalorder %v306, 1
        %vm311 = vcmp.eq.s32.totalorder %v307, 1
        %v312 = vsel %vm308, %v285, 2.0
        %v313 = vsel %vm309, %v286, 2.0
        %v314 = vsel %vm310, %v287, 2.0
        %v315 = vsel %vm311, %v288, 2.0
        %v316 = vlaneseq
        %v317 = vshrl.u32 %v316, 7
        %v318 = vld [vmem:[%s191] sm:$0xf]
        %v319 = vlaneseq
        %v320 = vshrl.u32 %v319, 7
        %v321 = vsub.s32 0, %v320
        %v322 = vrot.slane %v318, %v321
        %v323 = vlaneseq
        %v324 = vshrl.u32 %v323, 7
        %v325 = vsub.s32 1, %v324
        %v326 = vrot.slane %v318, %v325
        %v327 = vlaneseq
        %v328 = vshrl.u32 %v327, 7
        %v329 = vsub.s32 2, %v328
        %v330 = vrot.slane %v318, %v329
        %v331 = vlaneseq
        %v332 = vshrl.u32 %v331, 7
        %v333 = vsub.s32 3, %v332
        %v334 = vrot.slane %v318, %v333
        %vm335 = vcmp.eq.s32.totalorder %v322, %v317
        %vm336 = vcmp.eq.s32.totalorder %v326, %v317
        %vm337 = vcmp.eq.s32.totalorder %v330, %v317
        %vm338 = vcmp.eq.s32.totalorder %v334, %v317
        %v339 = vsel %vm335, 1, 0
        %v340 = vsel %vm336, 1, 0
        %v341 = vsel %vm337, 1, 0
        %v342 = vsel %vm338, 1, 0
        %v343 = vcvt.s32.f32 %v339
        %v344 = vcvt.s32.f32 %v340
        %v345 = vcvt.s32.f32 %v341
        %v346 = vcvt.s32.f32 %v342
        %v347 = vsub.f32 %v312, %v343
        %v348 = vsub.f32 %v313, %v344
        %v349 = vsub.f32 %v314, %v345
        %v350 = vsub.f32 %v315, %v346
        %vm351 = vcmp.le.f32.partialorder %v312, 0.0
        %vm352 = vcmp.le.f32.partialorder %v313, 0.0
        %vm353 = vcmp.le.f32.partialorder %v314, 0.0
        %vm354 = vcmp.le.f32.partialorder %v315, 0.0
        %v355 = vsel %vm351, %v347, 0.0
        %v356 = vsel %vm352, %v348, 0.0
        %v357 = vsel %vm353, %v349, 0.0
        %v358 = vsel %vm354, %v350, 0.0
        %v359 = vadd.f32 %v355, %v356
        %v360 = vadd.f32 %v359, %v357
        %v361 = vadd.f32 %v360, %v358
        %v362 = vld [vmem:[#allocation2] sm:$0xff]
        %v363 = vadd.f32 %v362, %v361
        %364 = vst [vmem:[#allocation2] sm:$0xff] %v363
        %vm365 = vcmp.le.f32.partialorder %v312, 0.06666667
        %vm366 = vcmp.le.f32.partialorder %v313, 0.06666667
        %vm367 = vcmp.le.f32.partialorder %v314, 0.06666667
        %vm368 = vcmp.le.f32.partialorder %v315, 0.06666667
        %v369 = vsel %vm365, %v347, 0.0
        %v370 = vsel %vm366, %v348, 0.0
        %v371 = vsel %vm367, %v349, 0.0
        %v372 = vsel %vm368, %v350, 0.0
        %v373 = vadd.f32 %v369, %v370
        %v374 = vadd.f32 %v373, %v371
        %v375 = vadd.f32 %v374, %v372
        %s376 = scalar_lea.vmem [#allocation2], 8
        %v377 = vld [vmem:[%s376] sm:$0xff]
        %v378 = vadd.f32 %v377, %v375
        %379 = vst [vmem:[%s376] sm:$0xff] %v378
        %vm380 = vcmp.le.f32.partialorder %v312, 0.13333334
        %vm381 = vcmp.le.f32.partialorder %v313, 0.13333334
        %vm382 = vcmp.le.f32.partialorder %v314, 0.13333334
        %vm383 = vcmp.le.f32.partialorder %v315, 0.13333334
        %v384 = vsel %vm380, %v347, 0.0
        %v385 = vsel %vm381, %v348, 0.0
        %v386 = vsel %vm382, %v349, 0.0
        %v387 = vsel %vm383, %v350, 0.0
        %v388 = vadd.f32 %v384, %v385
        %v389 = vadd.f32 %v388, %v386
        %v390 = vadd.f32 %v389, %v387
        %s391 = scalar_lea.vmem [#allocation2], 16
        %v392 = vld [vmem:[%s391] sm:$0xff]
        %v393 = vadd.f32 %v392, %v390
        %394 = vst [vmem:[%s391] sm:$0xff] %v393
        %vm395 = vcmp.le.f32.partialorder %v312, 0.2
        %vm396 = vcmp.le.f32.partialorder %v313, 0.2
        %vm397 = vcmp.le.f32.partialorder %v314, 0.2
        %vm398 = vcmp.le.f32.partialorder %v315, 0.2
        %v399 = vsel %vm395, %v347, 0.0
        %v400 = vsel %vm396, %v348, 0.0
        %v401 = vsel %vm397, %v349, 0.0
        %v402 = vsel %vm398, %v350, 0.0
        %v403 = vadd.f32 %v399, %v400
        %v404 = vadd.f32 %v403, %v401
        %v405 = vadd.f32 %v404, %v402
        %s406 = scalar_lea.vmem [#allocation2], 24
        %v407 = vld [vmem:[%s406] sm:$0xff]
        %v408 = vadd.f32 %v407, %v405
        %409 = vst [vmem:[%s406] sm:$0xff] %v408
        %vm410 = vcmp.le.f32.partialorder %v312, 0.26666668
        %vm411 = vcmp.le.f32.partialorder %v313, 0.26666668
        %vm412 = vcmp.le.f32.partialorder %v314, 0.26666668
        %vm413 = vcmp.le.f32.partialorder %v315, 0.26666668
        %v414 = vsel %vm410, %v347, 0.0
        %v415 = vsel %vm411, %v348, 0.0
        %v416 = vsel %vm412, %v349, 0.0
        %v417 = vsel %vm413, %v350, 0.0
        %v418 = vadd.f32 %v414, %v415
        %v419 = vadd.f32 %v418, %v416
        %v420 = vadd.f32 %v419, %v417
        %s421 = scalar_lea.vmem [#allocation2], 32
        %v422 = vld [vmem:[%s421] sm:$0xff]
        %v423 = vadd.f32 %v422, %v420
        %424 = vst [vmem:[%s421] sm:$0xff] %v423
        %vm425 = vcmp.le.f32.partialorder %v312, 0.33333334
        %vm426 = vcmp.le.f32.partialorder %v313, 0.33333334
        %vm427 = vcmp.le.f32.partialorder %v314, 0.33333334
        %vm428 = vcmp.le.f32.partialorder %v315, 0.33333334
        %v429 = vsel %vm425, %v347, 0.0
        %v430 = vsel %vm426, %v348, 0.0
        %v431 = vsel %vm427, %v349, 0.0
        %v432 = vsel %vm428, %v350, 0.0
        %v433 = vadd.f32 %v429, %v430
        %v434 = vadd.f32 %v433, %v431
        %v435 = vadd.f32 %v434, %v432
        %s436 = scalar_lea.vmem [#allocation2], 40
        %v437 = vld [vmem:[%s436] sm:$0xff]
        %v438 = vadd.f32 %v437, %v435
        %439 = vst [vmem:[%s436] sm:$0xff] %v438
        %vm440 = vcmp.le.f32.partialorder %v312, 0.4
        %vm441 = vcmp.le.f32.partialorder %v313, 0.4
        %vm442 = vcmp.le.f32.partialorder %v314, 0.4
        %vm443 = vcmp.le.f32.partialorder %v315, 0.4
        %v444 = vsel %vm440, %v347, 0.0
        %v445 = vsel %vm441, %v348, 0.0
        %v446 = vsel %vm442, %v349, 0.0
        %v447 = vsel %vm443, %v350, 0.0
        %v448 = vadd.f32 %v444, %v445
        %v449 = vadd.f32 %v448, %v446
        %v450 = vadd.f32 %v449, %v447
        %s451 = scalar_lea.vmem [#allocation2], 48
        %v452 = vld [vmem:[%s451] sm:$0xff]
        %v453 = vadd.f32 %v452, %v450
        %454 = vst [vmem:[%s451] sm:$0xff] %v453
        %vm455 = vcmp.le.f32.partialorder %v312, 0.46666667
        %vm456 = vcmp.le.f32.partialorder %v313, 0.46666667
        %vm457 = vcmp.le.f32.partialorder %v314, 0.46666667
        %vm458 = vcmp.le.f32.partialorder %v315, 0.46666667
        %v459 = vsel %vm455, %v347, 0.0
        %v460 = vsel %vm456, %v348, 0.0
        %v461 = vsel %vm457, %v349, 0.0
        %v462 = vsel %vm458, %v350, 0.0
        %v463 = vadd.f32 %v459, %v460
        %v464 = vadd.f32 %v463, %v461
        %v465 = vadd.f32 %v464, %v462
        %s466 = scalar_lea.vmem [#allocation2], 56
        %v467 = vld [vmem:[%s466] sm:$0xff]
        %v468 = vadd.f32 %v467, %v465
        %469 = vst [vmem:[%s466] sm:$0xff] %v468
        %vm470 = vcmp.le.f32.partialorder %v312, 0.53333336
        %vm471 = vcmp.le.f32.partialorder %v313, 0.53333336
        %vm472 = vcmp.le.f32.partialorder %v314, 0.53333336
        %vm473 = vcmp.le.f32.partialorder %v315, 0.53333336
        %v474 = vsel %vm470, %v347, 0.0
        %v475 = vsel %vm471, %v348, 0.0
        %v476 = vsel %vm472, %v349, 0.0
        %v477 = vsel %vm473, %v350, 0.0
        %v478 = vadd.f32 %v474, %v475
        %v479 = vadd.f32 %v478, %v476
        %v480 = vadd.f32 %v479, %v477
        %s481 = scalar_lea.vmem [#allocation2], 64
        %v482 = vld [vmem:[%s481] sm:$0xff]
        %v483 = vadd.f32 %v482, %v480
        %484 = vst [vmem:[%s481] sm:$0xff] %v483
        %vm485 = vcmp.le.f32.partialorder %v312, 0.6
        %vm486 = vcmp.le.f32.partialorder %v313, 0.6
        %vm487 = vcmp.le.f32.partialorder %v314, 0.6
        %vm488 = vcmp.le.f32.partialorder %v315, 0.6
        %v489 = vsel %vm485, %v347, 0.0
        %v490 = vsel %vm486, %v348, 0.0
        %v491 = vsel %vm487, %v349, 0.0
        %v492 = vsel %vm488, %v350, 0.0
        %v493 = vadd.f32 %v489, %v490
        %v494 = vadd.f32 %v493, %v491
        %v495 = vadd.f32 %v494, %v492
        %s496 = scalar_lea.vmem [#allocation2], 72
        %v497 = vld [vmem:[%s496] sm:$0xff]
        %v498 = vadd.f32 %v497, %v495
        %499 = vst [vmem:[%s496] sm:$0xff] %v498
        %vm500 = vcmp.le.f32.partialorder %v312, 0.6666667
        %vm501 = vcmp.le.f32.partialorder %v313, 0.6666667
        %vm502 = vcmp.le.f32.partialorder %v314, 0.6666667
        %vm503 = vcmp.le.f32.partialorder %v315, 0.6666667
        %v504 = vsel %vm500, %v347, 0.0
        %v505 = vsel %vm501, %v348, 0.0
        %v506 = vsel %vm502, %v349, 0.0
        %v507 = vsel %vm503, %v350, 0.0
        %v508 = vadd.f32 %v504, %v505
        %v509 = vadd.f32 %v508, %v506
        %v510 = vadd.f32 %v509, %v507
        %s511 = scalar_lea.vmem [#allocation2], 80
        %v512 = vld [vmem:[%s511] sm:$0xff]
        %v513 = vadd.f32 %v512, %v510
        %514 = vst [vmem:[%s511] sm:$0xff] %v513
        %vm515 = vcmp.le.f32.partialorder %v312, 0.73333335
        %vm516 = vcmp.le.f32.partialorder %v313, 0.73333335
        %vm517 = vcmp.le.f32.partialorder %v314, 0.73333335
        %vm518 = vcmp.le.f32.partialorder %v315, 0.73333335
        %v519 = vsel %vm515, %v347, 0.0
        %v520 = vsel %vm516, %v348, 0.0
        %v521 = vsel %vm517, %v349, 0.0
        %v522 = vsel %vm518, %v350, 0.0
        %v523 = vadd.f32 %v519, %v520
        %v524 = vadd.f32 %v523, %v521
        %v525 = vadd.f32 %v524, %v522
        %s526 = scalar_lea.vmem [#allocation2], 88
        %v527 = vld [vmem:[%s526] sm:$0xff]
        %v528 = vadd.f32 %v527, %v525
        %529 = vst [vmem:[%s526] sm:$0xff] %v528
        %vm530 = vcmp.le.f32.partialorder %v312, 0.8
        %vm531 = vcmp.le.f32.partialorder %v313, 0.8
        %vm532 = vcmp.le.f32.partialorder %v314, 0.8
        %vm533 = vcmp.le.f32.partialorder %v315, 0.8
        %v534 = vsel %vm530, %v347, 0.0
        %v535 = vsel %vm531, %v348, 0.0
        %v536 = vsel %vm532, %v349, 0.0
        %v537 = vsel %vm533, %v350, 0.0
        %v538 = vadd.f32 %v534, %v535
        %v539 = vadd.f32 %v538, %v536
        %v540 = vadd.f32 %v539, %v537
        %s541 = scalar_lea.vmem [#allocation2], 96
        %v542 = vld [vmem:[%s541] sm:$0xff]
        %v543 = vadd.f32 %v542, %v540
        %544 = vst [vmem:[%s541] sm:$0xff] %v543
        %vm545 = vcmp.le.f32.partialorder %v312, 0.8666667
        %vm546 = vcmp.le.f32.partialorder %v313, 0.8666667
        %vm547 = vcmp.le.f32.partialorder %v314, 0.8666667
        %vm548 = vcmp.le.f32.partialorder %v315, 0.8666667
        %v549 = vsel %vm545, %v347, 0.0
        %v550 = vsel %vm546, %v348, 0.0
        %v551 = vsel %vm547, %v349, 0.0
        %v552 = vsel %vm548, %v350, 0.0
        %v553 = vadd.f32 %v549, %v550
        %v554 = vadd.f32 %v553, %v551
        %v555 = vadd.f32 %v554, %v552
        %s556 = scalar_lea.vmem [#allocation2], 104
        %v557 = vld [vmem:[%s556] sm:$0xff]
        %v558 = vadd.f32 %v557, %v555
        %559 = vst [vmem:[%s556] sm:$0xff] %v558
        %vm560 = vcmp.le.f32.partialorder %v312, 0.93333334
        %vm561 = vcmp.le.f32.partialorder %v313, 0.93333334
        %vm562 = vcmp.le.f32.partialorder %v314, 0.93333334
        %vm563 = vcmp.le.f32.partialorder %v315, 0.93333334
        %v564 = vsel %vm560, %v347, 0.0
        %v565 = vsel %vm561, %v348, 0.0
        %v566 = vsel %vm562, %v349, 0.0
        %v567 = vsel %vm563, %v350, 0.0
        %v568 = vadd.f32 %v564, %v565
        %v569 = vadd.f32 %v568, %v566
        %v570 = vadd.f32 %v569, %v567
        %s571 = scalar_lea.vmem [#allocation2], 112
        %v572 = vld [vmem:[%s571] sm:$0xff]
        %v573 = vadd.f32 %v572, %v570
        %574 = vst [vmem:[%s571] sm:$0xff] %v573
        %vm575 = vcmp.le.f32.partialorder %v312, 1.0
        %vm576 = vcmp.le.f32.partialorder %v313, 1.0
        %vm577 = vcmp.le.f32.partialorder %v314, 1.0
        %vm578 = vcmp.le.f32.partialorder %v315, 1.0
        %v579 = vsel %vm575, %v347, 0.0
        %v580 = vsel %vm576, %v348, 0.0
        %v581 = vsel %vm577, %v349, 0.0
        %v582 = vsel %vm578, %v350, 0.0
        %v583 = vadd.f32 %v579, %v580
        %v584 = vadd.f32 %v583, %v581
        %v585 = vadd.f32 %v584, %v582
        %s586 = scalar_lea.vmem [#allocation2], 120
        %v587 = vld [vmem:[%s586] sm:$0xff]
        %v588 = vadd.f32 %v587, %v585
        %589 = vst [vmem:[%s586] sm:$0xff] %v588
        %p590 = scmp.eq.s32.totalorder %s16, 1
        // Predicated region
        $region37: #{_lambda_.1} parent=27 // pred_check
          %p591 = pneg %p590
        $region38: #{_lambda_.1} parent=27 // pred_check_branch
          %593 = sbr.rel (%p591) target = $region40
        $region39: #{_lambda_.1} parent=27 // pred_region
          %v594 = vld [vmem:[#allocation2] sm:$0xff]
          %595 = vadd.xlane.f32.xlu0 %v594
          %v596 = vpop.xlane.xlu0 %595
          %v597 = vld [vmem:[%s376] sm:$0xff]
          %598 = vadd.xlane.f32.xlu0 %v597
          %v599 = vpop.xlane.xlu0 %598
          %v600 = vsub.f32 %v599, %v596
          %v601 = vand.u32 2147483647, %v600
          %v602 = vadd.f32 %v601, 0.0
          %v603 = vld [vmem:[%s391] sm:$0xff]
          %604 = vadd.xlane.f32.xlu0 %v603
          %v605 = vpop.xlane.xlu0 %604
          %v606 = vsub.f32 %v605, %v599
          %v607 = vand.u32 2147483647, %v606
          %v608 = vadd.f32 %v602, %v607
          %v609 = vld [vmem:[%s406] sm:$0xff]
          %610 = vadd.xlane.f32.xlu0 %v609
          %v611 = vpop.xlane.xlu0 %610
          %v612 = vsub.f32 %v611, %v605
          %v613 = vand.u32 2147483647, %v612
          %v614 = vadd.f32 %v608, %v613
          %v615 = vld [vmem:[%s421] sm:$0xff]
          %616 = vadd.xlane.f32.xlu0 %v615
          %v617 = vpop.xlane.xlu0 %616
          %v618 = vsub.f32 %v617, %v611
          %v619 = vand.u32 2147483647, %v618
          %v620 = vadd.f32 %v614, %v619
          %v621 = vld [vmem:[%s436] sm:$0xff]
          %622 = vadd.xlane.f32.xlu0 %v621
          %v623 = vpop.xlane.xlu0 %622
          %v624 = vsub.f32 %v623, %v617
          %v625 = vand.u32 2147483647, %v624
          %v626 = vadd.f32 %v620, %v625
          %v627 = vld [vmem:[%s451] sm:$0xff]
          %628 = vadd.xlane.f32.xlu0 %v627
          %v629 = vpop.xlane.xlu0 %628
          %v630 = vsub.f32 %v629, %v623
          %v631 = vand.u32 2147483647, %v630
          %v632 = vadd.f32 %v626, %v631
          %v633 = vld [vmem:[%s466] sm:$0xff]
          %634 = vadd.xlane.f32.xlu0 %v633
          %v635 = vpop.xlane.xlu0 %634
          %v636 = vsub.f32 %v635, %v629
          %v637 = vand.u32 2147483647, %v636
          %v638 = vadd.f32 %v632, %v637
          %v639 = vld [vmem:[%s481] sm:$0xff]
          %640 = vadd.xlane.f32.xlu0 %v639
          %v641 = vpop.xlane.xlu0 %640
          %v642 = vsub.f32 %v641, %v635
          %v643 = vand.u32 2147483647, %v642
          %v644 = vadd.f32 %v638, %v643
          %v645 = vld [vmem:[%s496] sm:$0xff]
          %646 = vadd.xlane.f32.xlu0 %v645
          %v647 = vpop.xlane.xlu0 %646
          %v648 = vsub.f32 %v647, %v641
          %v649 = vand.u32 2147483647, %v648
          %v650 = vadd.f32 %v644, %v649
          %v651 = vld [vmem:[%s511] sm:$0xff]
          %652 = vadd.xlane.f32.xlu0 %v651
          %v653 = vpop.xlane.xlu0 %652
          %v654 = vsub.f32 %v653, %v647
          %v655 = vand.u32 2147483647, %v654
          %v656 = vadd.f32 %v650, %v655
          %v657 = vld [vmem:[%s526] sm:$0xff]
          %658 = vadd.xlane.f32.xlu0 %v657
          %v659 = vpop.xlane.xlu0 %658
          %v660 = vsub.f32 %v659, %v653
          %v661 = vand.u32 2147483647, %v660
          %v662 = vadd.f32 %v656, %v661
          %v663 = vld [vmem:[%s541] sm:$0xff]
          %664 = vadd.xlane.f32.xlu0 %v663
          %v665 = vpop.xlane.xlu0 %664
          %v666 = vsub.f32 %v665, %v659
          %v667 = vand.u32 2147483647, %v666
          %v668 = vadd.f32 %v662, %v667
          %v669 = vld [vmem:[%s556] sm:$0xff]
          %670 = vadd.xlane.f32.xlu0 %v669
          %v671 = vpop.xlane.xlu0 %670
          %v672 = vsub.f32 %v671, %v665
          %v673 = vand.u32 2147483647, %v672
          %v674 = vadd.f32 %v668, %v673
          %v675 = vld [vmem:[%s571] sm:$0xff]
          %676 = vadd.xlane.f32.xlu0 %v675
          %v677 = vpop.xlane.xlu0 %676
          %v678 = vsub.f32 %v677, %v671
          %v679 = vand.u32 2147483647, %v678
          %v680 = vadd.f32 %v674, %v679
          %v681 = vld [vmem:[%s586] sm:$0xff]
          %682 = vadd.xlane.f32.xlu0 %v681
          %v683 = vpop.xlane.xlu0 %682
          %v684 = vsub.f32 %v683, %v677
          %v685 = vand.u32 2147483647, %v684
          %v686 = vadd.f32 %v680, %v685
          %v687 = vmul.f32 %v686, 0.0016666667
          %vm688 = vcmask 7168
          %689 = vst.msk [vmem:[%s2] sm:$0xff] %vm688, %v687
        $region40: #{_lambda_.1} parent=27 // pred_fallthru
          _
        // Predicated region
        $region41: #{_lambda_.1} parent=27 // pred_check
          %p690 = pneg %p81
        $region42: #{_lambda_.1} parent=27 // pred_check_branch
          %692 = sbr.rel (%p690) target = $region44
        $region43: #{_lambda_.1} parent=27 // pred_region
          _
        $region44: #{_lambda_.1} parent=27 // pred_fallthru
          _
        // Predicated region
        $region45: #{_lambda_.1} parent=27 // pred_check
          %p693 = pneg %p81
        $region46: #{_lambda_.1} parent=27 // pred_check_branch
          %695 = sbr.rel (%p693) target = $region48
        $region47: #{_lambda_.1} parent=27 // pred_region
          _
        $region48: #{_lambda_.1} parent=27 // pred_fallthru
          _
      $region28: #{_lambda_.1} parent=5 // pred_fallthru
        _
      %p696 = scmp.le.s32.totalorder 2, %s11
      // Predicated region
      $region49: #{_lambda_.1} parent=5 // pred_check
        %p697 = pneg %p696
      $region50: #{_lambda_.1} parent=5 // pred_check_branch
        %699 = sbr.rel (%p697) target = $region52
      $region51: #{_lambda_.1} parent=5 // pred_region
        %s700 = ssub.s32 %s11, 2
      $region52: #{_lambda_.1} parent=5 // pred_fallthru
        _
    $region6: #{_lambda_.1} parent=1 // loop_footer
      %s15 = sadd.s32 1, %s11
    $region7: #{_lambda_.1} parent=1 // loop_footer_branch
      %10 = sbr.rel target = $region3
    $region8: #{_lambda_.1} parent=1 // loop_exit
      _
    %701 = vsyncpa [#allocation4], 1
    %s702 = scalar_lea.sflag [#allocation4], 1
    %703 = vsyncpa %s702, 1

</llo_original>
